<compile_context>
chip_gen: v7x
topology: tpu7x:2x2x1
jax: 0.10.0
libtpu: 0.0.40
codegen_flags: <defaults>
</compile_context>

<pallas_src>
import numpy as np
import jax
import jax.numpy as jnp
from jax import lax
from jax.experimental import pallas as pl
from jax.experimental.pallas import tpu as pltpu


def _round_up(x, m):
    return (x + m - 1) // m * m


# ----------------------------------------------------------------------------
# Pallas kernel 1: fused 3-layer GCN stack, one graph per grid point.
#   h1 = relu(A (X W1) + b1)
#   h2 = relu(A (h1 W2) + b2)
#   h3 = relu(A (h2 W3) + b3)
# bf16 MXU operands, f32 accumulation, f32 bias/ReLU epilogue.
# ----------------------------------------------------------------------------
def _gcn3_kernel(a_ref, x_ref, w1_ref, b1_ref, w2_ref, b2_ref, w3_ref, b3_ref,
                 h1_ref, h2_ref, h3_ref):
    a = a_ref[0]                                       # [NP, NP] bf16

    def layer(h_bf16, w_ref, b_ref):
        hw = jnp.dot(h_bf16, w_ref[...], preferred_element_type=jnp.float32)
        y = jnp.dot(a, hw.astype(jnp.bfloat16), preferred_element_type=jnp.float32)
        return jnp.maximum(y + b_ref[...], 0.0)        # f32 epilogue

    h1 = layer(x_ref[0], w1_ref, b1_ref)
    h1b = h1.astype(jnp.bfloat16)
    h1_ref[0] = h1b
    h2 = layer(h1b, w2_ref, b2_ref)
    h2b = h2.astype(jnp.bfloat16)
    h2_ref[0] = h2b
    h3 = layer(h2b, w3_ref, b3_ref)
    h3_ref[0] = h3.astype(jnp.bfloat16)


def gcn3_stack(a_batch, x_batch, pp):
    """a_batch: [G, NP, NP] bf16, x_batch: [G, NP, CINP] bf16 -> 3 x [G, NP, HP] bf16."""
    g, npad, _ = a_batch.shape
    cinp = x_batch.shape[2]
    hp = pp["w1p"].shape[1]

    flops = g * 2 * (npad * cinp * hp + 2 * npad * hp * hp + 3 * npad * npad * hp)
    bytes_accessed = (2 * (a_batch.size + x_batch.size)
                      + 2 * (pp["w1p"].size + pp["w2p"].size + pp["w3p"].size)
                      + 4 * 3 * hp
                      + 2 * 3 * g * npad * hp)

    h1, h2, h3 = pl.pallas_call(
        _gcn3_kernel,
        out_shape=tuple(jax.ShapeDtypeStruct((g, npad, hp), jnp.bfloat16)
                        for _ in range(3)),
        grid=(g,),
        in_specs=[
            pl.BlockSpec((1, npad, npad), lambda i: (i, 0, 0)),
            pl.BlockSpec((1, npad, cinp), lambda i: (i, 0, 0)),
            pl.BlockSpec((cinp, hp), lambda i: (0, 0)),
            pl.BlockSpec((1, hp), lambda i: (0, 0)),
            pl.BlockSpec((hp, hp), lambda i: (0, 0)),
            pl.BlockSpec((1, hp), lambda i: (0, 0)),
            pl.BlockSpec((hp, hp), lambda i: (0, 0)),
            pl.BlockSpec((1, hp), lambda i: (0, 0)),
        ],
        out_specs=tuple(pl.BlockSpec((1, npad, hp), lambda i: (i, 0, 0))
                        for _ in range(3)),
        compiler_params=pltpu.CompilerParams(dimension_semantics=("parallel",)),
        cost_estimate=pl.CostEstimate(flops=flops, transcendentals=0,
                                      bytes_accessed=bytes_accessed),
    )(a_batch, x_batch,
      pp["w1p"], pp["b1p"], pp["w2p"], pp["b2p"], pp["w3p"], pp["b3p"])
    return h1, h2, h3


# ----------------------------------------------------------------------------
# Pallas kernel 2: similarity + bilinear resize for all scales/batches at once.
#   out[b, s] = (P @ Xs[b,s]) @ (P @ Xt[b,s])^T      (reassociated form)
# P is the bilinear-interpolation matrix (align_corners=False), zero-padded to
# a lane-dense [128, MP] block; the output block is [128, 128] (sliced later).
# ----------------------------------------------------------------------------
def _sim_kernel(xs_ref, xt_ref, p_ref, o_ref):
    p = p_ref[...]                                                        # [RP, MP] bf16
    pxs = jnp.dot(p, xs_ref[0, 0], preferred_element_type=jnp.float32)    # [RP, HP] f32
    pxt = jnp.dot(p, xt_ref[0, 0], preferred_element_type=jnp.float32)    # [RP, HP] f32
    dn = (((1,), (1,)), ((), ()))                                         # A @ B^T
    o_ref[0, 0] = lax.dot_general(pxs, pxt, dn,
                                  preferred_element_type=jnp.float32)     # [RP, RP]


def similarity_all(ds_all, dt_all, p_pad, reshape):
    """ds_all, dt_all: [B, 3, MP, HP] bf16; p_pad: [RP, MP] bf16 -> [B, 3, R, R] f32."""
    b, s, mp, hp = ds_all.shape
    rp = p_pad.shape[0]

    flops = b * s * (2 * 2 * rp * mp * hp + 2 * rp * hp * rp)
    bytes_accessed = (2 * (ds_all.size + dt_all.size) + 2 * p_pad.size
                      + 4 * b * s * rp * rp)

    out = pl.pallas_call(
        _sim_kernel,
        out_shape=jax.ShapeDtypeStruct((b, s, rp, rp), jnp.float32),
        grid=(b, s),
        in_specs=[
            pl.BlockSpec((1, 1, mp, hp), lambda i, j: (i, j, 0, 0)),
            pl.BlockSpec((1, 1, mp, hp), lambda i, j: (i, j, 0, 0)),
            pl.BlockSpec((rp, mp), lambda i, j: (0, 0)),
        ],
        out_specs=pl.BlockSpec((1, 1, rp, rp), lambda i, j: (i, j, 0, 0)),
        compiler_params=pltpu.CompilerParams(
            dimension_semantics=("parallel", "parallel")),
        cost_estimate=pl.CostEstimate(flops=flops, transcendentals=0,
                                      bytes_accessed=bytes_accessed),
    )(ds_all, dt_all, p_pad)
    return out[:, :, :reshape, :reshape]


# ----------------------------------------------------------------------------
# Plain-JAX glue (graph construction, to_dense_batch, interpolation weights)
# ----------------------------------------------------------------------------
def bilinear_matrix(in_size, out_size):
    """Row-interpolation matrix matching F.interpolate(mode='bilinear', align_corners=False)."""
    scale = in_size / out_size
    i = np.arange(out_size, dtype=np.float64)
    src = np.maximum((i + 0.5) * scale - 0.5, 0.0)
    x0 = np.floor(src).astype(np.int64)
    x0 = np.minimum(x0, in_size - 1)
    x1 = np.minimum(x0 + 1, in_size - 1)
    w1 = src - x0
    w0 = 1.0 - w1
    p = np.zeros((out_size, in_size), dtype=np.float32)
    rows = np.arange(out_size)
    np.add.at(p, (rows, x0), w0)
    np.add.at(p, (rows, x1), w1)
    return p


def to_dense_batch_padded(h, nodes_list, mp):
    # TODO(synk): generic data-dependent scatter of to_dense_batch stays in plain JAX glue.
    b = len(nodes_list)
    hp = h.shape[1]
    dense = jnp.zeros((b, mp, hp), h.dtype)
    off = 0
    for i, n in enumerate(nodes_list):
        dense = dense.at[i, :n, :].set(h[off:off + n])
        off += n
    return dense


def build_norm_adj(src, dst, num_nodes):
    # TODO(synk): duplicate edges collapse to weight 1 here; torch_geometric would
    # count duplicated edge_index entries multiple times (multigraph semantics).
    a = jnp.zeros((num_nodes, num_nodes), jnp.float32)
    a = a.at[dst, src].set(1.0)
    a = a.at[src, dst].set(1.0)                      # undirected edges
    idx = jnp.arange(num_nodes)
    a = a.at[idx, idx].set(1.0)                      # add self loops
    deg = a.sum(axis=1)
    dis = lax.rsqrt(deg)
    return dis[:, None] * a * dis[None, :]


def make_graph(key, nodes_list, in_channels):
    keys = jax.random.split(key, len(nodes_list) + 1)
    x = jax.random.normal(keys[0], (sum(nodes_list), in_channels), jnp.float32)
    srcs, dsts = [], []
    off = 0
    for i, n in enumerate(nodes_list):
        ne = 2 * n
        k1, k2 = jax.random.split(keys[i + 1])
        s = jax.random.randint(k1, (ne,), 0, n)
        d = (s + jax.random.randint(k2, (ne,), 1, n)) % n   # no self loops
        srcs.append(s + off)
        dsts.append(d + off)
        off += n
    return x, jnp.concatenate(srcs), jnp.concatenate(dsts)


def glorot(key, shape):
    limit = float(np.sqrt(6.0 / (shape[0] + shape[1])))
    return jax.random.uniform(key, shape, jnp.float32, -limit, limit)


def init_params(key, in_channels, hidden_channels):
    ks = jax.random.split(key, 6)
    return {
        "w1": glorot(ks[0], (in_channels, hidden_channels)),
        "b1": 0.1 * jax.random.normal(ks[1], (hidden_channels,), jnp.float32),
        "w2": glorot(ks[2], (hidden_channels, hidden_channels)),
        "b2": 0.1 * jax.random.normal(ks[3], (hidden_channels,), jnp.float32),
        "w3": glorot(ks[4], (hidden_channels, hidden_channels)),
        "b3": 0.1 * jax.random.normal(ks[5], (hidden_channels,), jnp.float32),
    }


def pad_params(params, in_channels, hidden):
    """Pad weights/biases once (weights -> bf16 MXU operands, biases stay f32)."""
    cinp = _round_up(in_channels, 128)
    hp = _round_up(hidden, 128)

    def padw(w, r, c):
        wp = jnp.zeros((r, c), jnp.float32).at[:w.shape[0], :w.shape[1]].set(w)
        return wp.astype(jnp.bfloat16)

    def padb(bv):
        return jnp.zeros((1, hp), jnp.float32).at[0, :bv.shape[0]].set(bv)

    return {
        "w1p": padw(params["w1"], cinp, hp), "b1p": padb(params["b1"]),
        "w2p": padw(params["w2"], hp, hp),   "b2p": padb(params["b2"]),
        "w3p": padw(params["w3"], hp, hp),   "b3p": padb(params["b3"]),
    }


# ----------------------------------------------------------------------------
# Full GNN forward (Pallas kernels on the hot path)
# ----------------------------------------------------------------------------
def gnn_forward(params, x_s, a_s, ns_list, x_t, a_t, nt_list, reshape):
    in_channels = x_s.shape[1]
    hidden = params["w1"].shape[1]
    cinp = _round_up(in_channels, 128)
    hp = _round_up(hidden, 128)

    n_s, n_t = sum(ns_list), sum(nt_list)
    npad = _round_up(max(n_s, n_t), 128)   # 128-aligned K keeps MXU tiles unmasked

    # Pad adjacency / features exactly once, stack the two graphs so a single
    # fused 3-layer pallas_call with grid=(2,) handles both.
    def pad_graph(a, x, n):
        a_p = jnp.zeros((npad, npad), jnp.float32).at[:n, :n].set(a)
        x_p = jnp.zeros((npad, cinp), jnp.float32).at[:n, :in_channels].set(x)
        return a_p, x_p

    a_sp, x_sp = pad_graph(a_s, x_s, n_s)
    a_tp, x_tp = pad_graph(a_t, x_t, n_t)
    a_batch = jnp.stack([a_sp, a_tp]).astype(jnp.bfloat16)   # [2, NP, NP]
    x_batch = jnp.stack([x_sp, x_tp]).astype(jnp.bfloat16)   # [2, NP, CINP]

    pp = pad_params(params, in_channels, hidden)
    h1, h2, h3 = gcn3_stack(a_batch, x_batch, pp)            # each [2, NP, HP] bf16

    # Dense batches per scale, stacked to [B, 3, MP, HP] (columns already HP-padded).
    max_n = max(max(ns_list), max(nt_list))
    mp = _round_up(max_n, 128)
    rp = _round_up(reshape, 128)                             # lane-dense output block
    ds_all = jnp.stack([to_dense_batch_padded(h[0], ns_list, mp) for h in (h1, h2, h3)],
                       axis=1)                               # [B, 3, MP, HP] bf16
    dt_all = jnp.stack([to_dense_batch_padded(h[1], nt_list, mp) for h in (h1, h2, h3)],
                       axis=1)

    p_np = bilinear_matrix(max_n, reshape)
    p_pad = (jnp.zeros((rp, mp), jnp.float32)
             .at[:reshape, :max_n].set(jnp.asarray(p_np))).astype(jnp.bfloat16)

    return similarity_all(ds_all, dt_all, p_pad, reshape)    # [B, 3, R, R]


# ----------------------------------------------------------------------------
# Pure-JAX reference (f32, HIGHEST precision, unreassociated math)
# ----------------------------------------------------------------------------
def gnn_forward_ref(params, x_s, a_s, ns_list, x_t, a_t, nt_list, reshape):
    hi = lax.Precision.HIGHEST

    def layer(a, x, w, b):
        return jnp.maximum(
            jnp.dot(a, jnp.dot(x, w, precision=hi), precision=hi) + b[None, :], 0.0)

    def embed(x, a):
        h1 = layer(a, x, params["w1"], params["b1"])
        h2 = layer(a, h1, params["w2"], params["b2"])
        h3 = layer(a, h2, params["w3"], params["b3"])
        return h1, h2, h3

    s1, s2, s3 = embed(x_s, a_s)
    t1, t2, t3 = embed(x_t, a_t)
    max_n = max(max(ns_list), max(nt_list))
    p = jnp.asarray(bilinear_matrix(max_n, reshape))

    outs = []
    for sf, tf in ((s1, t1), (s2, t2), (s3, t3)):
        ds = to_dense_batch_padded(sf, ns_list, max_n)
        dt = to_dense_batch_padded(tf, nt_list, max_n)
        sim = jnp.einsum("bmh,bnh->bmn", ds, dt, precision=hi)
        out = jnp.einsum("rm,bmn,sn->brs", p, sim, p, precision=hi)
        outs.append(out[:, None])
    return jnp.concatenate(outs, axis=1)


if __name__ == "__main__":
    key = jax.random.PRNGKey(0)
    in_channels, hidden_channels, reshape = 4, 32, 16
    ns_list = [7, 6]   # nodes per source graph (batch of 2)
    nt_list = [8, 5]   # nodes per target graph (batch of 2)

    k_param, k_s, k_t = jax.random.split(key, 3)
    params = init_params(k_param, in_channels, hidden_channels)

    x_s, src_s, dst_s = make_graph(k_s, ns_list, in_channels)
    x_t, src_t, dst_t = make_graph(k_t, nt_list, in_channels)
    a_s = build_norm_adj(src_s, dst_s, sum(ns_list))
    a_t = build_norm_adj(src_t, dst_t, sum(nt_list))

    out = gnn_forward(params, x_s, a_s, ns_list, x_t, a_t, nt_list, reshape)
    out = jax.block_until_ready(out)

    ref = gnn_forward_ref(params, x_s, a_s, ns_list, x_t, a_t, nt_list, reshape)
    assert out.shape == (2, 3, reshape, reshape), out.shape
    max_err = float(jnp.max(jnp.abs(out - ref)))
    # bf16 MXU operands vs f32 HIGHEST reference -> tolerance scales with output magnitude.
    tol = 2e-2 * max(1.0, float(jnp.max(jnp.abs(ref))))
    assert max_err < tol, f"mismatch vs reference: {max_err} (tol {tol})"

    print("KERNEL_OK")
</pallas_src>

<mosaic_0001>
module attributes {stable_mosaic.version = 11 : i64} {
  func.func @_gcn3_kernel(%arg0: i32, %arg1: memref<1x128x128xbf16, #tpu.memory_space<vmem>>, %arg2: memref<1x128x128xbf16, #tpu.memory_space<vmem>>, %arg3: memref<128x128xbf16, #tpu.memory_space<vmem>>, %arg4: memref<1x128xf32, #tpu.memory_space<vmem>>, %arg5: memref<128x128xbf16, #tpu.memory_space<vmem>>, %arg6: memref<1x128xf32, #tpu.memory_space<vmem>>, %arg7: memref<128x128xbf16, #tpu.memory_space<vmem>>, %arg8: memref<1x128xf32, #tpu.memory_space<vmem>>, %arg9: memref<1x128x128xbf16, #tpu.memory_space<vmem>>, %arg10: memref<1x128x128xbf16, #tpu.memory_space<vmem>>, %arg11: memref<1x128x128xbf16, #tpu.memory_space<vmem>>) attributes {dimension_semantics = [#tpu.dimension_semantics<parallel>], iteration_bounds = array<i64: 2>, scalar_prefetch = 0 : i64, scratch_operands = 0 : i64, tpu.core_type = #tpu.core_type<tc>, window_params = [{transform_indices = @transform_0, window_bounds = array<i64: 1, 128, 128>}, {transform_indices = @transform_1, window_bounds = array<i64: 1, 128, 128>}, {pipeline_mode = #tpu.pipeline_mode<synchronous>, transform_indices = @transform_2, window_bounds = array<i64: 128, 128>}, {pipeline_mode = #tpu.pipeline_mode<synchronous>, transform_indices = @transform_3, window_bounds = array<i64: 1, 128>}, {pipeline_mode = #tpu.pipeline_mode<synchronous>, transform_indices = @transform_4, window_bounds = array<i64: 128, 128>}, {pipeline_mode = #tpu.pipeline_mode<synchronous>, transform_indices = @transform_5, window_bounds = array<i64: 1, 128>}, {pipeline_mode = #tpu.pipeline_mode<synchronous>, transform_indices = @transform_6, window_bounds = array<i64: 128, 128>}, {pipeline_mode = #tpu.pipeline_mode<synchronous>, transform_indices = @transform_7, window_bounds = array<i64: 1, 128>}, {transform_indices = @transform_8, window_bounds = array<i64: 1, 128, 128>}, {transform_indices = @transform_9, window_bounds = array<i64: 1, 128, 128>}, {transform_indices = @transform_10, window_bounds = array<i64: 1, 128, 128>}]} {
    %c0 = arith.constant 0 : index
    %c0_0 = arith.constant 0 : index
    %c0_1 = arith.constant 0 : index
    %0 = vector.load %arg1[%c0, %c0_0, %c0_1] : memref<1x128x128xbf16, #tpu.memory_space<vmem>>, vector<1x128x128xbf16>
    %1 = vector.shape_cast %0 : vector<1x128x128xbf16> to vector<128x128xbf16>
    %c0_2 = arith.constant 0 : index
    %c0_3 = arith.constant 0 : index
    %c0_4 = arith.constant 0 : index
    %2 = vector.load %arg2[%c0_2, %c0_3, %c0_4] : memref<1x128x128xbf16, #tpu.memory_space<vmem>>, vector<1x128x128xbf16>
    %3 = vector.shape_cast %2 : vector<1x128x128xbf16> to vector<128x128xbf16>
    %c0_5 = arith.constant 0 : index
    %c0_6 = arith.constant 0 : index
    %4 = vector.load %arg3[%c0_5, %c0_6] : memref<128x128xbf16, #tpu.memory_space<vmem>>, vector<128x128xbf16>
    %cst = arith.constant dense<0.000000e+00> : vector<128x128xf32>
    %5 = tpu.matmul %3, %4, %cst {dimension_numbers = #tpu.dot_dimension_numbers<[1], [0], [0], [1], [0, 0, 1, 1], [], []>} : vector<128x128xbf16>, vector<128x128xbf16>, vector<128x128xf32> -> vector<128x128xf32>
    %6 = arith.truncf %5 : vector<128x128xf32> to vector<128x128xbf16>
    %cst_7 = arith.constant dense<0.000000e+00> : vector<128x128xf32>
    %7 = tpu.matmul %1, %6, %cst_7 {dimension_numbers = #tpu.dot_dimension_numbers<[1], [0], [0], [1], [0, 0, 1, 1], [], []>} : vector<128x128xbf16>, vector<128x128xbf16>, vector<128x128xf32> -> vector<128x128xf32>
    %c0_8 = arith.constant 0 : index
    %c0_9 = arith.constant 0 : index
    %8 = vector.load %arg4[%c0_8, %c0_9] : memref<1x128xf32, #tpu.memory_space<vmem>>, vector<1x128xf32>
    %9 = vector.broadcast %8 : vector<1x128xf32> to vector<128x128xf32>
    %10 = arith.addf %7, %9 : vector<128x128xf32>
    %cst_10 = arith.constant 0.000000e+00 : f32
    %11 = vector.broadcast %cst_10 : f32 to vector<128x128xf32>
    %12 = arith.maximumf %10, %11 : vector<128x128xf32>
    %13 = arith.truncf %12 : vector<128x128xf32> to vector<128x128xbf16>
    %c0_11 = arith.constant 0 : index
    %c0_12 = arith.constant 0 : index
    %c0_13 = arith.constant 0 : index
    %14 = vector.load %arg9[%c0_11, %c0_12, %c0_13] : memref<1x128x128xbf16, #tpu.memory_space<vmem>>, vector<1x128x128xbf16>
    %15 = vector.shape_cast %14 : vector<1x128x128xbf16> to vector<128x128xbf16>
    %16 = vector.shape_cast %13 : vector<128x128xbf16> to vector<1x128x128xbf16>
    tpu.vector_store %arg9[%c0_11, %c0_12, %c0_13], %16 {strides = array<i32>} : memref<1x128x128xbf16, #tpu.memory_space<vmem>>, vector<1x128x128xbf16>,
    %c0_14 = arith.constant 0 : index
    %c0_15 = arith.constant 0 : index
    %17 = vector.load %arg5[%c0_14, %c0_15] : memref<128x128xbf16, #tpu.memory_space<vmem>>, vector<128x128xbf16>
    %cst_16 = arith.constant dense<0.000000e+00> : vector<128x128xf32>
    %18 = tpu.matmul %13, %17, %cst_16 {dimension_numbers = #tpu.dot_dimension_numbers<[1], [0], [0], [1], [0, 0, 1, 1], [], []>} : vector<128x128xbf16>, vector<128x128xbf16>, vector<128x128xf32> -> vector<128x128xf32>
    %19 = arith.truncf %18 : vector<128x128xf32> to vector<128x128xbf16>
    %cst_17 = arith.constant dense<0.000000e+00> : vector<128x128xf32>
    %20 = tpu.matmul %1, %19, %cst_17 {dimension_numbers = #tpu.dot_dimension_numbers<[1], [0], [0], [1], [0, 0, 1, 1], [], []>} : vector<128x128xbf16>, vector<128x128xbf16>, vector<128x128xf32> -> vector<128x128xf32>
    %c0_18 = arith.constant 0 : index
    %c0_19 = arith.constant 0 : index
    %21 = vector.load %arg6[%c0_18, %c0_19] : memref<1x128xf32, #tpu.memory_space<vmem>>, vector<1x128xf32>
    %22 = vector.broadcast %21 : vector<1x128xf32> to vector<128x128xf32>
    %23 = arith.addf %20, %22 : vector<128x128xf32>
    %cst_20 = arith.constant 0.000000e+00 : f32
    %24 = vector.broadcast %cst_20 : f32 to vector<128x128xf32>
    %25 = arith.maximumf %23, %24 : vector<128x128xf32>
    %26 = arith.truncf %25 : vector<128x128xf32> to vector<128x128xbf16>
    %c0_21 = arith.constant 0 : index
    %c0_22 = arith.constant 0 : index
    %c0_23 = arith.constant 0 : index
    %27 = vector.load %arg10[%c0_21, %c0_22, %c0_23] : memref<1x128x128xbf16, #tpu.memory_space<vmem>>, vector<1x128x128xbf16>
    %28 = vector.shape_cast %27 : vector<1x128x128xbf16> to vector<128x128xbf16>
    %29 = vector.shape_cast %26 : vector<128x128xbf16> to vector<1x128x128xbf16>
    tpu.vector_store %arg10[%c0_21, %c0_22, %c0_23], %29 {strides = array<i32>} : memref<1x128x128xbf16, #tpu.memory_space<vmem>>, vector<1x128x128xbf16>,
    %c0_24 = arith.constant 0 : index
    %c0_25 = arith.constant 0 : index
    %30 = vector.load %arg7[%c0_24, %c0_25] : memref<128x128xbf16, #tpu.memory_space<vmem>>, vector<128x128xbf16>
    %cst_26 = arith.constant dense<0.000000e+00> : vector<128x128xf32>
    %31 = tpu.matmul %26, %30, %cst_26 {dimension_numbers = #tpu.dot_dimension_numbers<[1], [0], [0], [1], [0, 0, 1, 1], [], []>} : vector<128x128xbf16>, vector<128x128xbf16>, vector<128x128xf32> -> vector<128x128xf32>
    %32 = arith.truncf %31 : vector<128x128xf32> to vector<128x128xbf16>
    %cst_27 = arith.constant dense<0.000000e+00> : vector<128x128xf32>
    %33 = tpu.matmul %1, %32, %cst_27 {dimension_numbers = #tpu.dot_dimension_numbers<[1], [0], [0], [1], [0, 0, 1, 1], [], []>} : vector<128x128xbf16>, vector<128x128xbf16>, vector<128x128xf32> -> vector<128x128xf32>
    %c0_28 = arith.constant 0 : index
    %c0_29 = arith.constant 0 : index
    %34 = vector.load %arg8[%c0_28, %c0_29] : memref<1x128xf32, #tpu.memory_space<vmem>>, vector<1x128xf32>
    %35 = vector.broadcast %34 : vector<1x128xf32> to vector<128x128xf32>
    %36 = arith.addf %33, %35 : vector<128x128xf32>
    %cst_30 = arith.constant 0.000000e+00 : f32
    %37 = vector.broadcast %cst_30 : f32 to vector<128x128xf32>
    %38 = arith.maximumf %36, %37 : vector<128x128xf32>
    %39 = arith.truncf %38 : vector<128x128xf32> to vector<128x128xbf16>
    %c0_31 = arith.constant 0 : index
    %c0_32 = arith.constant 0 : index
    %c0_33 = arith.constant 0 : index
    %40 = vector.load %arg11[%c0_31, %c0_32, %c0_33] : memref<1x128x128xbf16, #tpu.memory_space<vmem>>, vector<1x128x128xbf16>
    %41 = vector.shape_cast %40 : vector<1x128x128xbf16> to vector<128x128xbf16>
    %42 = vector.shape_cast %39 : vector<128x128xbf16> to vector<1x128x128xbf16>
    tpu.vector_store %arg11[%c0_31, %c0_32, %c0_33], %42 {strides = array<i32>} : memref<1x128x128xbf16, #tpu.memory_space<vmem>>, vector<1x128x128xbf16>,
    return
  }
  func.func @transform_0(%arg0: i32) -> (i32, i32, i32) {
    %c0_i32 = arith.constant 0 : i32
    %c0_i32_0 = arith.constant 0 : i32
    %c0_i32_1 = arith.constant 0 : i32
    return %arg0, %c0_i32, %c0_i32_0 : i32, i32, i32
  }
  func.func @transform_1(%arg0: i32) -> (i32, i32, i32) {
    %c0_i32 = arith.constant 0 : i32
    %c0_i32_0 = arith.constant 0 : i32
    %c0_i32_1 = arith.constant 0 : i32
    return %arg0, %c0_i32, %c0_i32_0 : i32, i32, i32
  }
  func.func @transform_2(%arg0: i32) -> (i32, i32) {
    %c0_i32 = arith.constant 0 : i32
    %c0_i32_0 = arith.constant 0 : i32
    %c0_i32_1 = arith.constant 0 : i32
    return %c0_i32, %c0_i32_0 : i32, i32
  }
  func.func @transform_3(%arg0: i32) -> (i32, i32) {
    %c0_i32 = arith.constant 0 : i32
    %c0_i32_0 = arith.constant 0 : i32
    %c0_i32_1 = arith.constant 0 : i32
    return %c0_i32, %c0_i32_0 : i32, i32
  }
  func.func @transform_4(%arg0: i32) -> (i32, i32) {
    %c0_i32 = arith.constant 0 : i32
    %c0_i32_0 = arith.constant 0 : i32
    %c0_i32_1 = arith.constant 0 : i32
    return %c0_i32, %c0_i32_0 : i32, i32
  }
  func.func @transform_5(%arg0: i32) -> (i32, i32) {
    %c0_i32 = arith.constant 0 : i32
    %c0_i32_0 = arith.constant 0 : i32
    %c0_i32_1 = arith.constant 0 : i32
    return %c0_i32, %c0_i32_0 : i32, i32
  }
  func.func @transform_6(%arg0: i32) -> (i32, i32) {
    %c0_i32 = arith.constant 0 : i32
    %c0_i32_0 = arith.constant 0 : i32
    %c0_i32_1 = arith.constant 0 : i32
    return %c0_i32, %c0_i32_0 : i32, i32
  }
  func.func @transform_7(%arg0: i32) -> (i32, i32) {
    %c0_i32 = arith.constant 0 : i32
    %c0_i32_0 = arith.constant 0 : i32
    %c0_i32_1 = arith.constant 0 : i32
    return %c0_i32, %c0_i32_0 : i32, i32
  }
  func.func @transform_8(%arg0: i32) -> (i32, i32, i32) {
    %c0_i32 = arith.constant 0 : i32
    %c0_i32_0 = arith.constant 0 : i32
    %c0_i32_1 = arith.constant 0 : i32
    return %arg0, %c0_i32, %c0_i32_0 : i32, i32, i32
  }
  func.func @transform_9(%arg0: i32) -> (i32, i32, i32) {
    %c0_i32 = arith.constant 0 : i32
    %c0_i32_0 = arith.constant 0 : i32
    %c0_i32_1 = arith.constant 0 : i32
    return %arg0, %c0_i32, %c0_i32_0 : i32, i32, i32
  }
  func.func @transform_10(%arg0: i32) -> (i32, i32, i32) {
    %c0_i32 = arith.constant 0 : i32
    %c0_i32_0 = arith.constant 0 : i32
    %c0_i32_1 = arith.constant 0 : i32
    return %arg0, %c0_i32, %c0_i32_0 : i32, i32, i32
  }
}

</mosaic_0001>

<llo_original>
// kernel: tpu_custom_call.1
$region0: #{tpu_custom_call.1}
  #allocation0 [shape = 'u32[]', space=smem, size = 0x4, offset = 0x4, fixed_abs, tag = 'smem constant byte address 0x4 - core index']
  #allocation1 [shape = 'u32[144,128]{1,0:T(1,128)}', space=vmem, size = 0x12000, scoped, tag = 'internal scratch']
  %s0 = inlined_call_operand.hbm [shape: bf16[2,128,128], index: 0, kind: input, shape index: {}]
  %s1 = inlined_call_operand.hbm [shape: bf16[2,128,128], index: 1, kind: input, shape index: {}]
  %s2 = inlined_call_operand.hbm [shape: bf16[128,128], index: 2, kind: input, shape index: {}]
  %s3 = inlined_call_operand.vmem [shape: f32[1,128], index: 3, kind: input, shape index: {}]
  %s4 = inlined_call_operand.hbm [shape: bf16[128,128], index: 4, kind: input, shape index: {}]
  %s5 = inlined_call_operand.vmem [shape: f32[1,128], index: 5, kind: input, shape index: {}]
  %s6 = inlined_call_operand.hbm [shape: bf16[128,128], index: 6, kind: input, shape index: {}]
  %s7 = inlined_call_operand.vmem [shape: f32[1,128], index: 7, kind: input, shape index: {}]
  %s8 = inlined_call_operand.hbm [shape: bf16[2,128,128], index: 8, kind: output, shape index: {0}]
  %s9 = inlined_call_operand.hbm [shape: bf16[2,128,128], index: 9, kind: output, shape index: {1}]
  %s10 = inlined_call_operand.hbm [shape: bf16[2,128,128], index: 10, kind: output, shape index: {2}]
  %11 = xla_tuple %s8, %s9, %s10
  %s12 = sld [smem:[#allocation0]]
  $region101: #{tpu_custom_call.1} parent=0
    _
  %s14 = ssub.s32 1, %s12
  %s15 = scalar_select 0, %s14, %s12
  $region1: #{tpu_custom_call.1} parent=0
    #allocation2 [shape = 'u8[65536]{0}', space=vmem, size = 0x10000, scoped, tag = 'input window, operand 0']
    #allocation3 [shape = 's32[2]{0}', space=sflag, size = 0x8, scoped, tag = 'scoped memory for tpu_custom_call.1']
    #allocation4 [shape = 's32[2]{0}', space=sflag, size = 0x8, scoped, tag = 'scoped memory for tpu_custom_call.1']
    #allocation5 [shape = 'u8[65536]{0}', space=vmem, size = 0x10000, scoped, tag = 'input window, operand 1']
    #allocation6 [shape = 's32[2]{0}', space=sflag, size = 0x8, scoped, tag = 'scoped memory for tpu_custom_call.1']
    #allocation7 [shape = 'u8[32768]{0}', space=vmem, size = 0x8000, scoped, tag = 'input window, operand 2, single buffered']
    #allocation8 [shape = 'u8[32768]{0}', space=vmem, size = 0x8000, scoped, tag = 'input window, operand 4, single buffered']
    #allocation9 [shape = 's32[1]{0}', space=sflag, size = 0x4, scoped, tag = 'scoped memory for tpu_custom_call.1']
    #allocation10 [shape = 'u8[32768]{0}', space=vmem, size = 0x8000, scoped, tag = 'input window, operand 6, single buffered']
    #allocation11 [shape = 'u8[65536]{0}', space=vmem, size = 0x10000, scoped, tag = 'output window, operand 0']
    #allocation12 [shape = 'u8[65536]{0}', space=vmem, size = 0x10000, scoped, tag = 'output window, operand 1']
    #allocation13 [shape = 's32[2]{0}', space=sflag, size = 0x8, scoped, tag = 'scoped memory for tpu_custom_call.1']
    #allocation14 [shape = 'u8[65536]{0}', space=vmem, size = 0x10000, scoped, tag = 'output window, operand 2']
    %16 = vsyncpa [#allocation3], 0
    %s17 = scalar_lea.sflag [#allocation3], 1
    %18 = vsyncpa %s17, 0
    %19 = vsyncpa [#allocation6], 0
    %s20 = scalar_lea.sflag [#allocation6], 1
    %21 = vsyncpa %s20, 0
    %22 = vsyncpa [#allocation9], 0
    %23 = vsyncpa [#allocation4], 0
    %s24 = scalar_lea.sflag [#allocation4], 1
    %25 = vsyncpa %s24, 0
    %26 = vsyncpa [#allocation13], 0
    %s27 = scalar_lea.sflag [#allocation13], 1
    %28 = vsyncpa %s27, 0
    loop: start=0, step=1, limit=4
    $region2: #{tpu_custom_call.1} parent=1 // loop_pre_header
      _
    $region3: #{tpu_custom_call.1} parent=1 // loop_header
      %s30 = sphi 0, %s34
      %p31 = scmp.ge.s32.totalorder %s30, 4
      %s40 = sphi 0, %s42
      %s43 = sphi 0, %s40
      %s44 = sphi 0, %s43
      %s60 = sphi 0, %s44
      %s66 = sphi 0, %s68
      %s69 = sphi 0, %s66
      %s70 = sphi 0, %s69
      %s86 = sphi 0, %s70
      %s90 = sphi 0, %s90
      %s92 = sphi 0, %s90
      %s93 = sphi 0, %s92
      %s107 = sphi 0, %s93
      %s111 = sphi 0, %s111
      %s113 = sphi 0, %s111
      %s114 = sphi 0, %s113
      %s128 = sphi 0, %s114
      %s132 = sphi 0, %s132
      %s134 = sphi 0, %s132
      %s135 = sphi 0, %s134
      %s149 = sphi 0, %s135
      %s153 = sphi 0, %s153
      %s155 = sphi 0, %s153
      %s156 = sphi 0, %s155
      %s170 = sphi 0, %s156
      %s174 = sphi 0, %s174
      %s176 = sphi 0, %s174
      %s177 = sphi 0, %s176
      %s191 = sphi 0, %s177
      %s195 = sphi 0, %s195
      %s197 = sphi 0, %s195
      %s198 = sphi 0, %s197
      %s212 = sphi 0, %s198
      %s218 = sphi 0, %s220
      %s221 = sphi 0, %s218
      %s222 = sphi 0, %s221
      %s238 = sphi 0, %s222
      %s244 = sphi 0, %s246
      %s247 = sphi 0, %s244
      %s248 = sphi 0, %s247
      %s264 = sphi 0, %s248
      %s270 = sphi 0, %s272
      %s273 = sphi 0, %s270
      %s274 = sphi 0, %s273
      %s290 = sphi 0, %s274
    $region4: #{tpu_custom_call.1} parent=1 // loop_header_branch
      %33 = sbr.rel (%p31) target = $region8
    $region5: #{tpu_custom_call.1} parent=1 // loop_body
      %s35 = ssub.s32 %s30, 1
      %s36 = ssub.s32 %s30, 2
      %s37 = sadd.s32 %s30, 1
      %s38 = ssub.s32 %s30, %s37
      %p39 = scmp.eq.s32.totalorder %s38, 0
      %s41 = sadd.s32 %s40, 1
      %s42 = scalar_select %p39, %s40, %s41
      %p45 = pneg %p39
      %p46 = scmp.eq.s32.totalorder %s30, 1
      %p47 = por %p45, %p46
      %p48 = scmp.ne.s32.totalorder %s40, %s43
      %p49 = scmp.eq.s32.totalorder %s30, 0
      %p50 = por %p48, %p49
      %p51 = scmp.ne.s32.totalorder %s40, %s43
      %p52 = scmp.eq.s32.totalorder %s35, 1
      %p53 = por %p51, %p52
      %p54 = scmp.ne.s32.totalorder %s43, %s44
      %p55 = scmp.eq.s32.totalorder %s35, 0
      %p56 = por %p54, %p55
      %p57 = scmp.ne.s32.totalorder %s43, %s44
      %p58 = scmp.eq.s32.totalorder %s36, 1
      %p59 = por %p57, %p58
      %p61 = scmp.ne.s32.totalorder %s44, %s60
      %p62 = scmp.eq.s32.totalorder %s36, 0
      %p63 = por %p61, %p62
      %s64 = ssub.s32 %s30, %s37
      %p65 = scmp.eq.s32.totalorder %s64, 0
      %s67 = sadd.s32 %s66, 1
      %s68 = scalar_select %p65, %s66, %s67
      %p71 = pneg %p65
      %p72 = scmp.eq.s32.totalorder %s30, 1
      %p73 = por %p71, %p72
      %p74 = scmp.ne.s32.totalorder %s66, %s69
      %p75 = scmp.eq.s32.totalorder %s30, 0
      %p76 = por %p74, %p75
      %p77 = scmp.ne.s32.totalorder %s66, %s69
      %p78 = scmp.eq.s32.totalorder %s35, 1
      %p79 = por %p77, %p78
      %p80 = scmp.ne.s32.totalorder %s69, %s70
      %p81 = scmp.eq.s32.totalorder %s35, 0
      %p82 = por %p80, %p81
      %p83 = scmp.ne.s32.totalorder %s69, %s70
      %p84 = scmp.eq.s32.totalorder %s36, 1
      %p85 = por %p83, %p84
      %p87 = scmp.ne.s32.totalorder %s70, %s86
      %p88 = scmp.eq.s32.totalorder %s36, 0
      %p89 = por %p87, %p88
      %s91 = sadd.s32 %s90, 1
      %p94 = scmp.eq.s32.totalorder %s30, 1
      %p95 = scmp.ne.s32.totalorder %s90, %s92
      %p96 = scmp.eq.s32.totalorder %s30, 0
      %p97 = por %p95, %p96
      %p98 = scmp.ne.s32.totalorder %s90, %s92
      %p99 = scmp.eq.s32.totalorder %s35, 1
      %p100 = por %p98, %p99
      %p101 = scmp.ne.s32.totalorder %s92, %s93
      %p102 = scmp.eq.s32.totalorder %s35, 0
      %p103 = por %p101, %p102
      %p104 = scmp.ne.s32.totalorder %s92, %s93
      %p105 = scmp.eq.s32.totalorder %s36, 1
      %p106 = por %p104, %p105
      %p108 = scmp.ne.s32.totalorder %s93, %s107
      %p109 = scmp.eq.s32.totalorder %s36, 0
      %p110 = por %p108, %p109
      %s112 = sadd.s32 %s111, 1
      %p115 = scmp.eq.s32.totalorder %s30, 1
      %p116 = scmp.ne.s32.totalorder %s111, %s113
      %p117 = scmp.eq.s32.totalorder %s30, 0
      %p118 = por %p116, %p117
      %p119 = scmp.ne.s32.totalorder %s111, %s113
      %p120 = scmp.eq.s32.totalorder %s35, 1
      %p121 = por %p119, %p120
      %p122 = scmp.ne.s32.totalorder %s113, %s114
      %p123 = scmp.eq.s32.totalorder %s35, 0
      %p124 = por %p122, %p123
      %p125 = scmp.ne.s32.totalorder %s113, %s114
      %p126 = scmp.eq.s32.totalorder %s36, 1
      %p127 = por %p125, %p126
      %p129 = scmp.ne.s32.totalorder %s114, %s128
      %p130 = scmp.eq.s32.totalorder %s36, 0
      %p131 = por %p129, %p130
      %s133 = sadd.s32 %s132, 1
      %p136 = scmp.eq.s32.totalorder %s30, 1
      %p137 = scmp.ne.s32.totalorder %s132, %s134
      %p138 = scmp.eq.s32.totalorder %s30, 0
      %p139 = por %p137, %p138
      %p140 = scmp.ne.s32.totalorder %s132, %s134
      %p141 = scmp.eq.s32.totalorder %s35, 1
      %p142 = por %p140, %p141
      %p143 = scmp.ne.s32.totalorder %s134, %s135
      %p144 = scmp.eq.s32.totalorder %s35, 0
      %p145 = por %p143, %p144
      %p146 = scmp.ne.s32.totalorder %s134, %s135
      %p147 = scmp.eq.s32.totalorder %s36, 1
      %p148 = por %p146, %p147
      %p150 = scmp.ne.s32.totalorder %s135, %s149
      %p151 = scmp.eq.s32.totalorder %s36, 0
      %p152 = por %p150, %p151
      %s154 = sadd.s32 %s153, 1
      %p157 = scmp.eq.s32.totalorder %s30, 1
      %p158 = scmp.ne.s32.totalorder %s153, %s155
      %p159 = scmp.eq.s32.totalorder %s30, 0
      %p160 = por %p158, %p159
      %p161 = scmp.ne.s32.totalorder %s153, %s155
      %p162 = scmp.eq.s32.totalorder %s35, 1
      %p163 = por %p161, %p162
      %p164 = scmp.ne.s32.totalorder %s155, %s156
      %p165 = scmp.eq.s32.totalorder %s35, 0
      %p166 = por %p164, %p165
      %p167 = scmp.ne.s32.totalorder %s155, %s156
      %p168 = scmp.eq.s32.totalorder %s36, 1
      %p169 = por %p167, %p168
      %p171 = scmp.ne.s32.totalorder %s156, %s170
      %p172 = scmp.eq.s32.totalorder %s36, 0
      %p173 = por %p171, %p172
      %s175 = sadd.s32 %s174, 1
      %p178 = scmp.eq.s32.totalorder %s30, 1
      %p179 = scmp.ne.s32.totalorder %s174, %s176
      %p180 = scmp.eq.s32.totalorder %s30, 0
      %p181 = por %p179, %p180
      %p182 = scmp.ne.s32.totalorder %s174, %s176
      %p183 = scmp.eq.s32.totalorder %s35, 1
      %p184 = por %p182, %p183
      %p185 = scmp.ne.s32.totalorder %s176, %s177
      %p186 = scmp.eq.s32.totalorder %s35, 0
      %p187 = por %p185, %p186
      %p188 = scmp.ne.s32.totalorder %s176, %s177
      %p189 = scmp.eq.s32.totalorder %s36, 1
      %p190 = por %p188, %p189
      %p192 = scmp.ne.s32.totalorder %s177, %s191
      %p193 = scmp.eq.s32.totalorder %s36, 0
      %p194 = por %p192, %p193
      %s196 = sadd.s32 %s195, 1
      %p199 = scmp.eq.s32.totalorder %s30, 1
      %p200 = scmp.ne.s32.totalorder %s195, %s197
      %p201 = scmp.eq.s32.totalorder %s30, 0
      %p202 = por %p200, %p201
      %p203 = scmp.ne.s32.totalorder %s195, %s197
      %p204 = scmp.eq.s32.totalorder %s35, 1
      %p205 = por %p203, %p204
      %p206 = scmp.ne.s32.totalorder %s197, %s198
      %p207 = scmp.eq.s32.totalorder %s35, 0
      %p208 = por %p206, %p207
      %p209 = scmp.ne.s32.totalorder %s197, %s198
      %p210 = scmp.eq.s32.totalorder %s36, 1
      %p211 = por %p209, %p210
      %p213 = scmp.ne.s32.totalorder %s198, %s212
      %p214 = scmp.eq.s32.totalorder %s36, 0
      %p215 = por %p213, %p214
      %s216 = ssub.s32 %s30, %s37
      %p217 = scmp.eq.s32.totalorder %s216, 0
      %s219 = sadd.s32 %s218, 1
      %s220 = scalar_select %p217, %s218, %s219
      %p223 = pneg %p217
      %p224 = scmp.eq.s32.totalorder %s30, 1
      %p225 = por %p223, %p224
      %p226 = scmp.ne.s32.totalorder %s218, %s221
      %p227 = scmp.eq.s32.totalorder %s30, 0
      %p228 = por %p226, %p227
      %p229 = scmp.ne.s32.totalorder %s218, %s221
      %p230 = scmp.eq.s32.totalorder %s35, 1
      %p231 = por %p229, %p230
      %p232 = scmp.ne.s32.totalorder %s221, %s222
      %p233 = scmp.eq.s32.totalorder %s35, 0
      %p234 = por %p232, %p233
      %p235 = scmp.ne.s32.totalorder %s221, %s222
      %p236 = scmp.eq.s32.totalorder %s36, 1
      %p237 = por %p235, %p236
      %p239 = scmp.ne.s32.totalorder %s222, %s238
      %p240 = scmp.eq.s32.totalorder %s36, 0
      %p241 = por %p239, %p240
      %s242 = ssub.s32 %s30, %s37
      %p243 = scmp.eq.s32.totalorder %s242, 0
      %s245 = sadd.s32 %s244, 1
      %s246 = scalar_select %p243, %s244, %s245
      %p249 = pneg %p243
      %p250 = scmp.eq.s32.totalorder %s30, 1
      %p251 = por %p249, %p250
      %p252 = scmp.ne.s32.totalorder %s244, %s247
      %p253 = scmp.eq.s32.totalorder %s30, 0
      %p254 = por %p252, %p253
      %p255 = scmp.ne.s32.totalorder %s244, %s247
      %p256 = scmp.eq.s32.totalorder %s35, 1
      %p257 = por %p255, %p256
      %p258 = scmp.ne.s32.totalorder %s247, %s248
      %p259 = scmp.eq.s32.totalorder %s35, 0
      %p260 = por %p258, %p259
      %p261 = scmp.ne.s32.totalorder %s247, %s248
      %p262 = scmp.eq.s32.totalorder %s36, 1
      %p263 = por %p261, %p262
      %p265 = scmp.ne.s32.totalorder %s248, %s264
      %p266 = scmp.eq.s32.totalorder %s36, 0
      %p267 = por %p265, %p266
      %s268 = ssub.s32 %s30, %s37
      %p269 = scmp.eq.s32.totalorder %s268, 0
      %s271 = sadd.s32 %s270, 1
      %s272 = scalar_select %p269, %s270, %s271
      %p275 = pneg %p269
      %p276 = scmp.eq.s32.totalorder %s30, 1
      %p277 = por %p275, %p276
      %p278 = scmp.ne.s32.totalorder %s270, %s273
      %p279 = scmp.eq.s32.totalorder %s30, 0
      %p280 = por %p278, %p279
      %p281 = scmp.ne.s32.totalorder %s270, %s273
      %p282 = scmp.eq.s32.totalorder %s35, 1
      %p283 = por %p281, %p282
      %p284 = scmp.ne.s32.totalorder %s273, %s274
      %p285 = scmp.eq.s32.totalorder %s35, 0
      %p286 = por %p284, %p285
      %p287 = scmp.ne.s32.totalorder %s273, %s274
      %p288 = scmp.eq.s32.totalorder %s36, 1
      %p289 = por %p287, %p288
      %p291 = scmp.ne.s32.totalorder %s274, %s290
      %p292 = scmp.eq.s32.totalorder %s36, 0
      %p293 = por %p291, %p292
      %p294 = scmp.le.s32.totalorder 1, %s30
      %p295 = scmp.lt.s32.totalorder %s30, 3
      %p296 = pnand %p294, %p295
      %p297 = pneg %p296
      // Predicated region
      $region9: #{tpu_custom_call.1} parent=5 // pred_check
        _
      $region10: #{tpu_custom_call.1} parent=5 // pred_check_branch
        %299 = sbr.rel (%p296) target = $region12
      $region11: #{tpu_custom_call.1} parent=5 // pred_region
        %s300 = ssub.s32 %s30, 1
        // Predicated region
        $region13: #{tpu_custom_call.1} parent=11 // pred_check
          %p301 = pneg %p103
        $region14: #{tpu_custom_call.1} parent=11 // pred_check_branch
          %303 = sbr.rel (%p301) target = $region16
        $region15: #{tpu_custom_call.1} parent=11 // pred_region
          %s305 = ssub.s32 1024, 1024
          %306 = vsyncadd [#allocation6], %s305
          %s307 = sshll.u32 [#allocation7], 4
          %s308 = int_to_ptr.vmem [resolvable:$true] %s307
          %313 = dma.hbm_to_vmem [thread:$0]  %s2, 1024, %s308, [#allocation6], 64, 64, 4
        $region16: #{tpu_custom_call.1} parent=11 // pred_fallthru
          _
        // Predicated region
        $region17: #{tpu_custom_call.1} parent=11 // pred_check
          %p314 = pneg %p124
        $region18: #{tpu_custom_call.1} parent=11 // pred_check_branch
          %316 = sbr.rel (%p314) target = $region20
        $region19: #{tpu_custom_call.1} parent=11 // pred_region
          _
        $region20: #{tpu_custom_call.1} parent=11 // pred_fallthru
          _
        // Predicated region
        $region21: #{tpu_custom_call.1} parent=11 // pred_check
          %p317 = pneg %p145
        $region22: #{tpu_custom_call.1} parent=11 // pred_check_branch
          %319 = sbr.rel (%p317) target = $region24
        $region23: #{tpu_custom_call.1} parent=11 // pred_region
          %s321 = ssub.s32 1024, 1024
          %322 = vsyncadd [#allocation9], %s321
          %s323 = sshll.u32 [#allocation8], 4
          %s324 = int_to_ptr.vmem [resolvable:$true] %s323
          %329 = dma.hbm_to_vmem [thread:$0]  %s4, 1024, %s324, [#allocation9], 64, 64, 4
        $region24: #{tpu_custom_call.1} parent=11 // pred_fallthru
          _
        // Predicated region
        $region25: #{tpu_custom_call.1} parent=11 // pred_check
          %p330 = pneg %p166
        $region26: #{tpu_custom_call.1} parent=11 // pred_check_branch
          %332 = sbr.rel (%p330) target = $region28
        $region27: #{tpu_custom_call.1} parent=11 // pred_region
          _
        $region28: #{tpu_custom_call.1} parent=11 // pred_fallthru
          _
        // Predicated region
        $region29: #{tpu_custom_call.1} parent=11 // pred_check
          %p333 = pneg %p187
        $region30: #{tpu_custom_call.1} parent=11 // pred_check_branch
          %335 = sbr.rel (%p333) target = $region32
        $region31: #{tpu_custom_call.1} parent=11 // pred_region
          %s337 = ssub.s32 1024, 1024
          %338 = vsyncadd [#allocation9], %s337
          %s339 = sshll.u32 [#allocation10], 4
          %s340 = int_to_ptr.vmem [resolvable:$true] %s339
          %345 = dma.hbm_to_vmem [thread:$0]  %s6, 1024, %s340, [#allocation9], 64, 64, 4
        $region32: #{tpu_custom_call.1} parent=11 // pred_fallthru
          _
        // Predicated region
        $region33: #{tpu_custom_call.1} parent=11 // pred_check
          %p346 = pneg %p208
        $region34: #{tpu_custom_call.1} parent=11 // pred_check_branch
          %348 = sbr.rel (%p346) target = $region36
        $region35: #{tpu_custom_call.1} parent=11 // pred_region
          _
        $region36: #{tpu_custom_call.1} parent=11 // pred_fallthru
          _
      $region12: #{tpu_custom_call.1} parent=5 // pred_fallthru
        _
      %p349 = scmp.lt.s32.totalorder %s30, 2
      // Predicated region
      $region37: #{tpu_custom_call.1} parent=5 // pred_check
        %p350 = pneg %p349
      $region38: #{tpu_custom_call.1} parent=5 // pred_check_branch
        %352 = sbr.rel (%p350) target = $region40
      $region39: #{tpu_custom_call.1} parent=5 // pred_region
        // Predicated region
        $region41: #{tpu_custom_call.1} parent=39 // pred_check
          %p353 = pneg %p50
        $region42: #{tpu_custom_call.1} parent=39 // pred_check_branch
          %355 = sbr.rel (%p353) target = $region44
        $region43: #{tpu_custom_call.1} parent=39 // pred_region
          %s356 = sand.u32 %s40, 1
          %s357 = scalar_lea.sflag [#allocation3], %s356
          %s358 = sand.u32 %s40, 1
          %s359 = smul.addr %s358, 64
          %s360 = scalar_lea.vmem [#allocation2], %s359
          %s362 = ssub.s32 1024, 1024
          %363 = vsyncadd %s357, %s362
          %s364 = smul.addr %s30, 16
          %s365 = smul.addr %s364, 64
          %s366 = scalar_lea.hbm %s0, %s365
          %s367 = sshll.u32 %s360, 4
          %s368 = int_to_ptr.vmem [resolvable:$true] %s367
          %373 = dma.hbm_to_vmem [thread:$0]  %s366, 1024, %s368, %s357, 64, 64, 4
        $region44: #{tpu_custom_call.1} parent=39 // pred_fallthru
          _
        // Predicated region
        $region45: #{tpu_custom_call.1} parent=39 // pred_check
          %p374 = pneg %p76
        $region46: #{tpu_custom_call.1} parent=39 // pred_check_branch
          %376 = sbr.rel (%p374) target = $region48
        $region47: #{tpu_custom_call.1} parent=39 // pred_region
          %s377 = sand.u32 %s30, 1
          %s378 = scalar_lea.sflag [#allocation6], %s377
          %s379 = sand.u32 %s66, 1
          %s380 = smul.addr %s379, 64
          %s381 = scalar_lea.vmem [#allocation5], %s380
          %s383 = ssub.s32 1024, 1024
          %384 = vsyncadd %s378, %s383
          %s385 = smul.addr %s30, 16
          %s386 = smul.addr %s385, 64
          %s387 = scalar_lea.hbm %s1, %s386
          %s388 = sshll.u32 %s381, 4
          %s389 = int_to_ptr.vmem [resolvable:$true] %s388
          %394 = dma.hbm_to_vmem [thread:$0]  %s387, 1024, %s389, %s378, 64, 64, 4
        $region48: #{tpu_custom_call.1} parent=39 // pred_fallthru
          _
      $region40: #{tpu_custom_call.1} parent=5 // pred_fallthru
        _
      %p395 = scmp.le.s32.totalorder 1, %s30
      %p396 = scmp.lt.s32.totalorder %s30, 3
      %p397 = pnand %p395, %p396
      %p398 = pneg %p397
      // Predicated region
      $region49: #{tpu_custom_call.1} parent=5 // pred_check
        _
      $region50: #{tpu_custom_call.1} parent=5 // pred_check_branch
        %400 = sbr.rel (%p397) target = $region52
      $region51: #{tpu_custom_call.1} parent=5 // pred_region
        %s401 = ssub.s32 %s30, 1
        %s402 = sand.u32 %s43, 1
        %s403 = scalar_lea.sflag [#allocation3], %s402
        %s404 = sand.u32 %s43, 1
        %s405 = smul.addr %s404, 64
        %s406 = scalar_lea.vmem [#allocation2], %s405
        // Predicated region
        $region53: #{tpu_custom_call.1} parent=51 // pred_check
          %p407 = pneg %p56
        $region54: #{tpu_custom_call.1} parent=51 // pred_check_branch
          %409 = sbr.rel (%p407) target = $region56
        $region55: #{tpu_custom_call.1} parent=51 // pred_region
          %410 = dma.done %s403, 1024
        $region56: #{tpu_custom_call.1} parent=51 // pred_fallthru
          _
        %s411 = sand.u32 %s35, 1
        %s412 = scalar_lea.sflag [#allocation6], %s411
        %s413 = sand.u32 %s69, 1
        %s414 = smul.addr %s413, 64
        %s415 = scalar_lea.vmem [#allocation5], %s414
        // Predicated region
        $region57: #{tpu_custom_call.1} parent=51 // pred_check
          %p416 = pneg %p82
        $region58: #{tpu_custom_call.1} parent=51 // pred_check_branch
          %418 = sbr.rel (%p416) target = $region60
        $region59: #{tpu_custom_call.1} parent=51 // pred_region
          %419 = dma.done %s412, 1024
        $region60: #{tpu_custom_call.1} parent=51 // pred_fallthru
          _
        // Predicated region
        $region61: #{tpu_custom_call.1} parent=51 // pred_check
          %p420 = pneg %p103
        $region62: #{tpu_custom_call.1} parent=51 // pred_check_branch
          %422 = sbr.rel (%p420) target = $region64
        $region63: #{tpu_custom_call.1} parent=51 // pred_region
          %423 = dma.done [#allocation6], 1024
        $region64: #{tpu_custom_call.1} parent=51 // pred_fallthru
          _
        // Predicated region
        $region65: #{tpu_custom_call.1} parent=51 // pred_check
          %p424 = pneg %p145
        $region66: #{tpu_custom_call.1} parent=51 // pred_check_branch
          %426 = sbr.rel (%p424) target = $region68
        $region67: #{tpu_custom_call.1} parent=51 // pred_region
          %427 = dma.done [#allocation9], 1024
        $region68: #{tpu_custom_call.1} parent=51 // pred_fallthru
          _
        // Predicated region
        $region69: #{tpu_custom_call.1} parent=51 // pred_check
          %p428 = pneg %p187
        $region70: #{tpu_custom_call.1} parent=51 // pred_check_branch
          %430 = sbr.rel (%p428) target = $region72
        $region71: #{tpu_custom_call.1} parent=51 // pred_region
          %431 = dma.done [#allocation9], 1024
        $region72: #{tpu_custom_call.1} parent=51 // pred_fallthru
          _
        %s432 = sand.u32 %s43, 1
        %s433 = scalar_lea.sflag [#allocation3], %s432
        %s434 = sand.u32 %s43, 1
        %s435 = smul.addr %s434, 64
        %s436 = scalar_lea.vmem [#allocation2], %s435
        %p437 = pneg %p56
        %p438 = pneg %p53
        %s439 = sand.u32 %s35, 1
        %s440 = scalar_lea.sflag [#allocation6], %s439
        %s441 = sand.u32 %s69, 1
        %s442 = smul.addr %s441, 64
        %s443 = scalar_lea.vmem [#allocation5], %s442
        %p444 = pneg %p82
        %p445 = pneg %p79
        %p446 = pneg %p103
        %p447 = pneg %p100
        %p448 = pneg %p124
        %p449 = pneg %p121
        %p450 = pneg %p145
        %p451 = pneg %p142
        %p452 = pneg %p166
        %p453 = pneg %p163
        %p454 = pneg %p187
        %p455 = pneg %p184
        %p456 = pneg %p208
        %p457 = pneg %p205
        %p458 = pneg %p234
        %p459 = pneg %p231
        %s460 = sand.u32 %s221, 1
        %s461 = scalar_lea.sflag [#allocation4], %s460
        %s462 = sand.u32 %s221, 1
        %s463 = smul.addr %s462, 64
        %s464 = scalar_lea.vmem [#allocation11], %s463
        %p465 = pneg %p260
        %p466 = pneg %p257
        %s467 = sand.u32 %s35, 1
        %s468 = scalar_lea.sflag [#allocation13], %s467
        %s469 = sand.u32 %s247, 1
        %s470 = smul.addr %s469, 64
        %s471 = scalar_lea.vmem [#allocation12], %s470
        %p472 = pneg %p286
        %p473 = pneg %p283
        %s474 = sand.u32 %s35, 1
        %s475 = scalar_lea.sflag [#allocation13], %s474
        %s476 = sand.u32 %s273, 1
        %s477 = smul.addr %s476, 64
        %s478 = scalar_lea.vmem [#allocation14], %s477
        %v480 = vld [vmem:[%s406] sm:$0xf]
        %v481 = vld [vmem:[%s406 + $0x4] sm:$0xf]
        %v482 = vld [vmem:[%s406 + $0x8] sm:$0xf]
        %v483 = vld [vmem:[%s406 + $0xc] sm:$0xf]
        %v484 = vld [vmem:[%s406 + $0x10] sm:$0xf]
        %v485 = vld [vmem:[%s406 + $0x14] sm:$0xf]
        %v486 = vld [vmem:[%s406 + $0x18] sm:$0xf]
        %v487 = vld [vmem:[%s406 + $0x1c] sm:$0xf]
        %v488 = vld [vmem:[%s406 + $0x20] sm:$0xf]
        %v489 = vld [vmem:[%s406 + $0x24] sm:$0xf]
        %v490 = vld [vmem:[%s406 + $0x28] sm:$0xf]
        %v491 = vld [vmem:[%s406 + $0x2c] sm:$0xf]
        %v492 = vld [vmem:[%s406 + $0x30] sm:$0xf]
        %v493 = vld [vmem:[%s406 + $0x34] sm:$0xf]
        %v494 = vld [vmem:[%s406 + $0x38] sm:$0xf]
        %v495 = vld [vmem:[%s406 + $0x3c] sm:$0xf]
        %v496 = vld [vmem:[%s415] sm:$0xf]
        %v497 = vld [vmem:[%s415 + $0x4] sm:$0xf]
        %v498 = vld [vmem:[%s415 + $0x8] sm:$0xf]
        %v499 = vld [vmem:[%s415 + $0xc] sm:$0xf]
        %v500 = vld [vmem:[%s415 + $0x10] sm:$0xf]
        %v501 = vld [vmem:[%s415 + $0x14] sm:$0xf]
        %v502 = vld [vmem:[%s415 + $0x18] sm:$0xf]
        %v503 = vld [vmem:[%s415 + $0x1c] sm:$0xf]
        %v504 = vld [vmem:[%s415 + $0x20] sm:$0xf]
        %v505 = vld [vmem:[%s415 + $0x24] sm:$0xf]
        %v506 = vld [vmem:[%s415 + $0x28] sm:$0xf]
        %v507 = vld [vmem:[%s415 + $0x2c] sm:$0xf]
        %v508 = vld [vmem:[%s415 + $0x30] sm:$0xf]
        %v509 = vld [vmem:[%s415 + $0x34] sm:$0xf]
        %v510 = vld [vmem:[%s415 + $0x38] sm:$0xf]
        %v511 = vld [vmem:[%s415 + $0x3c] sm:$0xf]
        %v512 = vld [vmem:[#allocation7] sm:$0xf]
        %v513 = vld [vmem:[#allocation7 + $0x4] sm:$0xf]
        %v514 = vld [vmem:[#allocation7 + $0x8] sm:$0xf]
        %v515 = vld [vmem:[#allocation7 + $0xc] sm:$0xf]
        %v516 = vld [vmem:[#allocation7 + $0x10] sm:$0xf]
        %v517 = vld [vmem:[#allocation7 + $0x14] sm:$0xf]
        %v518 = vld [vmem:[#allocation7 + $0x18] sm:$0xf]
        %v519 = vld [vmem:[#allocation7 + $0x1c] sm:$0xf]
        %v520 = vld [vmem:[#allocation7 + $0x20] sm:$0xf]
        %v521 = vld [vmem:[#allocation7 + $0x24] sm:$0xf]
        %v522 = vld [vmem:[#allocation7 + $0x28] sm:$0xf]
        %v523 = vld [vmem:[#allocation7 + $0x2c] sm:$0xf]
        %v524 = vld [vmem:[#allocation7 + $0x30] sm:$0xf]
        %v525 = vld [vmem:[#allocation7 + $0x34] sm:$0xf]
        %v526 = vld [vmem:[#allocation7 + $0x38] sm:$0xf]
        %v527 = vld [vmem:[#allocation7 + $0x3c] sm:$0xf]
        %v544 = vunpack.c.l.b16 %v496
        %v545 = vunpack.c.l.b16 %v497
        %v546 = vunpack.c.l.b16 %v498
        %v547 = vunpack.c.l.b16 %v499
        %v548 = vunpack.c.l.b16 %v500
        %v549 = vunpack.c.l.b16 %v501
        %v550 = vunpack.c.l.b16 %v502
        %v551 = vunpack.c.l.b16 %v503
        %v552 = vunpack.c.l.b16 %v504
        %v553 = vunpack.c.l.b16 %v505
        %v554 = vunpack.c.l.b16 %v506
        %v555 = vunpack.c.l.b16 %v507
        %v556 = vunpack.c.l.b16 %v508
        %v557 = vunpack.c.l.b16 %v509
        %v558 = vunpack.c.l.b16 %v510
        %v559 = vunpack.c.l.b16 %v511
        %v560 = vpack.c.b16 %v545, %v544
        %v561 = vpack.c.b16 %v547, %v546
        %v562 = vpack.c.b16 %v549, %v548
        %v563 = vpack.c.b16 %v551, %v550
        %v564 = vpack.c.b16 %v553, %v552
        %v565 = vpack.c.b16 %v555, %v554
        %v566 = vpack.c.b16 %v557, %v556
        %v567 = vpack.c.b16 %v559, %v558
        %v592 = vunpack.c.l.b16 %v512
        %v593 = vunpack.c.l.b16 %v513
        %v594 = vunpack.c.l.b16 %v514
        %v595 = vunpack.c.l.b16 %v515
        %v596 = vunpack.c.l.b16 %v516
        %v597 = vunpack.c.l.b16 %v517
        %v598 = vunpack.c.l.b16 %v518
        %v599 = vunpack.c.l.b16 %v519
        %v600 = vunpack.c.l.b16 %v520
        %v601 = vunpack.c.l.b16 %v521
        %v602 = vunpack.c.l.b16 %v522
        %v603 = vunpack.c.l.b16 %v523
        %v604 = vunpack.c.l.b16 %v524
        %v605 = vunpack.c.l.b16 %v525
        %v606 = vunpack.c.l.b16 %v526
        %v607 = vunpack.c.l.b16 %v527
        %v608 = vpack.c.b16 %v593, %v592
        %v609 = vpack.c.b16 %v595, %v594
        %v610 = vpack.c.b16 %v597, %v596
        %v611 = vpack.c.b16 %v599, %v598
        %v612 = vpack.c.b16 %v601, %v600
        %v613 = vpack.c.b16 %v603, %v602
        %v614 = vpack.c.b16 %v605, %v604
        %v615 = vpack.c.b16 %v607, %v606
        %624 = vmatprep.subr.bf16.mxu0 0
        %625 = vmatpush1.bf16.msra.mxu0 %v608
        %626 = vmatprep.subr.bf16.mxu0 0
        %627 = vmatpush1.bf16.msra.mxu0 %v609
        %628 = vmatprep.subr.bf16.mxu0 0
        %629 = vmatpush1.bf16.msra.mxu0 %v610
        %630 = vmatprep.subr.bf16.mxu0 0
        %631 = vmatpush1.bf16.msra.mxu0 %v611
        %632 = vmatprep.subr.bf16.mxu0 0
        %633 = vmatpush1.bf16.msra.mxu0 %v612
        %634 = vmatprep.subr.bf16.mxu0 0
        %635 = vmatpush1.bf16.msra.mxu0 %v613
        %636 = vmatprep.subr.bf16.mxu0 0
        %637 = vmatpush1.bf16.msra.mxu0 %v614
        %638 = vmatprep.subr.bf16.mxu0 0
        %639 = vmatpush1.bf16.msra.mxu0 %v615
        %640 = vmatprep.subr.bf16.mxu0 0
        %641 = vmatpush1.bf16.msra.mxu0 0
        %642 = vmatprep.subr.bf16.mxu0 0
        %643 = vmatpush1.bf16.msra.mxu0 0
        %644 = vmatprep.subr.bf16.mxu0 0
        %645 = vmatpush1.bf16.msra.mxu0 0
        %646 = vmatprep.subr.bf16.mxu0 0
        %647 = vmatpush1.bf16.msra.mxu0 0
        %648 = vmatprep.subr.bf16.mxu0 0
        %649 = vmatpush1.bf16.msra.mxu0 0
        %650 = vmatprep.subr.bf16.mxu0 0
        %651 = vmatpush1.bf16.msra.mxu0 0
        %652 = vmatprep.subr.bf16.mxu0 0
        %653 = vmatpush1.bf16.msra.mxu0 0
        %654 = vmatprep.subr.bf16.mxu0 0
        %655 = vmatpush1.bf16.msra.mxu0 0
        %656 = vmatprep.mubr.bf16.mxu0 0
        %657 = vmatmul.mubr.bf16.gmra.mrb[0].mxu0 %v560
        %v658 = vpop.f32.mrb[0].mxu0
        %v659 = vadd.f32 0.0, %v658
        %v660 = vpop.f32.mrb[0].mxu0
        %v661 = vpop.f32.mrb[0].mxu0
        %v662 = vadd.f32 0.0, %v661
        %v663 = vpop.f32.mrb[0].mxu0
        %664 = vmatprep.mubr.bf16.mxu0 0
        %665 = vmatmul.mubr.bf16.gmra.mrb[0].mxu0 %v561
        %v666 = vpop.f32.mrb[0].mxu0
        %v667 = vadd.f32 0.0, %v666
        %v668 = vpop.f32.mrb[0].mxu0
        %v669 = vpop.f32.mrb[0].mxu0
        %v670 = vadd.f32 0.0, %v669
        %v671 = vpop.f32.mrb[0].mxu0
        %672 = vmatprep.mubr.bf16.mxu0 0
        %673 = vmatmul.mubr.bf16.gmra.mrb[0].mxu0 %v562
        %v674 = vpop.f32.mrb[0].mxu0
        %v675 = vadd.f32 0.0, %v674
        %v676 = vpop.f32.mrb[0].mxu0
        %v677 = vpop.f32.mrb[0].mxu0
        %v678 = vadd.f32 0.0, %v677
        %v679 = vpop.f32.mrb[0].mxu0
        %680 = vmatprep.mubr.bf16.mxu0 0
        %681 = vmatmul.mubr.bf16.gmra.mrb[0].mxu0 %v563
        %v682 = vpop.f32.mrb[0].mxu0
        %v683 = vadd.f32 0.0, %v682
        %v684 = vpop.f32.mrb[0].mxu0
        %v685 = vpop.f32.mrb[0].mxu0
        %v686 = vadd.f32 0.0, %v685
        %v687 = vpop.f32.mrb[0].mxu0
        %688 = vmatprep.mubr.bf16.mxu0 0
        %689 = vmatmul.mubr.bf16.gmra.mrb[0].mxu0 %v564
        %v690 = vpop.f32.mrb[0].mxu0
        %v691 = vadd.f32 0.0, %v690
        %v692 = vpop.f32.mrb[0].mxu0
        %v693 = vpop.f32.mrb[0].mxu0
        %v694 = vadd.f32 0.0, %v693
        %v695 = vpop.f32.mrb[0].mxu0
        %696 = vmatprep.mubr.bf16.mxu0 0
        %697 = vmatmul.mubr.bf16.gmra.mrb[0].mxu0 %v565
        %v698 = vpop.f32.mrb[0].mxu0
        %v699 = vadd.f32 0.0, %v698
        %v700 = vpop.f32.mrb[0].mxu0
        %v701 = vpop.f32.mrb[0].mxu0
        %v702 = vadd.f32 0.0, %v701
        %v703 = vpop.f32.mrb[0].mxu0
        %704 = vmatprep.mubr.bf16.mxu0 0
        %705 = vmatmul.mubr.bf16.gmra.mrb[0].mxu0 %v566
        %v706 = vpop.f32.mrb[0].mxu0
        %v707 = vadd.f32 0.0, %v706
        %v708 = vpop.f32.mrb[0].mxu0
        %v709 = vpop.f32.mrb[0].mxu0
        %v710 = vadd.f32 0.0, %v709
        %v711 = vpop.f32.mrb[0].mxu0
        %712 = vmatprep.mubr.bf16.mxu0 0
        %713 = vmatmul.mubr.bf16.gmra.mrb[0].mxu0 %v567
        %v714 = vpop.f32.mrb[0].mxu0
        %v715 = vadd.f32 0.0, %v714
        %v716 = vpop.f32.mrb[0].mxu0
        %v717 = vpop.f32.mrb[0].mxu0
        %v718 = vadd.f32 0.0, %v717
        %v719 = vpop.f32.mrb[0].mxu0
        %720 = vdwg.mxu0
        %v721 = vpack.c.bf16 %v662, %v659
        %v722 = vpack.c.bf16 %v670, %v667
        %v723 = vpack.c.bf16 %v678, %v675
        %v724 = vpack.c.bf16 %v686, %v683
        %v725 = vpack.c.bf16 %v694, %v691
        %v726 = vpack.c.bf16 %v702, %v699
        %v727 = vpack.c.bf16 %v710, %v707
        %v728 = vpack.c.bf16 %v718, %v715
        %v729 = vld [vmem:[%s3] sm:$0x1]
        %v731 = vlaneseq
        %v732 = vshrl.u32 %v731, 7
        %v733 = vsub.s32 0, %v732
        %v734 = vrot.slane %v729, %v733
        %v752 = vunpack.c.l.b16 %v480
        %v753 = vunpack.c.l.b16 %v481
        %v754 = vunpack.c.l.b16 %v482
        %v755 = vunpack.c.l.b16 %v483
        %v756 = vunpack.c.l.b16 %v484
        %v757 = vunpack.c.l.b16 %v485
        %v758 = vunpack.c.l.b16 %v486
        %v759 = vunpack.c.l.b16 %v487
        %v760 = vunpack.c.l.b16 %v488
        %v761 = vunpack.c.l.b16 %v489
        %v762 = vunpack.c.l.b16 %v490
        %v763 = vunpack.c.l.b16 %v491
        %v764 = vunpack.c.l.b16 %v492
        %v765 = vunpack.c.l.b16 %v493
        %v766 = vunpack.c.l.b16 %v494
        %v767 = vunpack.c.l.b16 %v495
        %v768 = vpack.c.b16 %v753, %v752
        %v769 = vpack.c.b16 %v755, %v754
        %v770 = vpack.c.b16 %v757, %v756
        %v771 = vpack.c.b16 %v759, %v758
        %v772 = vpack.c.b16 %v761, %v760
        %v773 = vpack.c.b16 %v763, %v762
        %v774 = vpack.c.b16 %v765, %v764
        %v775 = vpack.c.b16 %v767, %v766
        %784 = vmatprep.subr.bf16.mxu0 0
        %785 = vmatpush1.bf16.msra.mxu0 %v721
        %786 = vmatprep.subr.bf16.mxu0 0
        %787 = vmatpush1.bf16.msra.mxu0 %v722
        %788 = vmatprep.subr.bf16.mxu0 0
        %789 = vmatpush1.bf16.msra.mxu0 %v723
        %790 = vmatprep.subr.bf16.mxu0 0
        %791 = vmatpush1.bf16.msra.mxu0 %v724
        %792 = vmatprep.subr.bf16.mxu0 0
        %793 = vmatpush1.bf16.msra.mxu0 %v725
        %794 = vmatprep.subr.bf16.mxu0 0
        %795 = vmatpush1.bf16.msra.mxu0 %v726
        %796 = vmatprep.subr.bf16.mxu0 0
        %797 = vmatpush1.bf16.msra.mxu0 %v727
        %798 = vmatprep.subr.bf16.mxu0 0
        %799 = vmatpush1.bf16.msra.mxu0 %v728
        %800 = vmatprep.subr.bf16.mxu0 0
        %801 = vmatpush1.bf16.msra.mxu0 0
        %802 = vmatprep.subr.bf16.mxu0 0
        %803 = vmatpush1.bf16.msra.mxu0 0
        %804 = vmatprep.subr.bf16.mxu0 0
        %805 = vmatpush1.bf16.msra.mxu0 0
        %806 = vmatprep.subr.bf16.mxu0 0
        %807 = vmatpush1.bf16.msra.mxu0 0
        %808 = vmatprep.subr.bf16.mxu0 0
        %809 = vmatpush1.bf16.msra.mxu0 0
        %810 = vmatprep.subr.bf16.mxu0 0
        %811 = vmatpush1.bf16.msra.mxu0 0
        %812 = vmatprep.subr.bf16.mxu0 0
        %813 = vmatpush1.bf16.msra.mxu0 0
        %814 = vmatprep.subr.bf16.mxu0 0
        %815 = vmatpush1.bf16.msra.mxu0 0
        %816 = vmatprep.mubr.bf16.mxu0 0
        %817 = vmatmul.mubr.bf16.gmra.mrb[0].mxu0 %v768
        %v818 = vpop.f32.mrb[0].mxu0
        %v819 = vadd.f32 %v734, %v818
        %v820 = vpop.f32.mrb[0].mxu0
        %v821 = vpop.f32.mrb[0].mxu0
        %v822 = vadd.f32 %v734, %v821
        %v823 = vpop.f32.mrb[0].mxu0
        %824 = vmatprep.mubr.bf16.mxu0 0
        %825 = vmatmul.mubr.bf16.gmra.mrb[0].mxu0 %v769
        %v826 = vpop.f32.mrb[0].mxu0
        %v827 = vadd.f32 %v734, %v826
        %v828 = vpop.f32.mrb[0].mxu0
        %v829 = vpop.f32.mrb[0].mxu0
        %v830 = vadd.f32 %v734, %v829
        %v831 = vpop.f32.mrb[0].mxu0
        %832 = vmatprep.mubr.bf16.mxu0 0
        %833 = vmatmul.mubr.bf16.gmra.mrb[0].mxu0 %v770
        %v834 = vpop.f32.mrb[0].mxu0
        %v835 = vadd.f32 %v734, %v834
        %v836 = vpop.f32.mrb[0].mxu0
        %v837 = vpop.f32.mrb[0].mxu0
        %v838 = vadd.f32 %v734, %v837
        %v839 = vpop.f32.mrb[0].mxu0
        %840 = vmatprep.mubr.bf16.mxu0 0
        %841 = vmatmul.mubr.bf16.gmra.mrb[0].mxu0 %v771
        %v842 = vpop.f32.mrb[0].mxu0
        %v843 = vadd.f32 %v734, %v842
        %v844 = vpop.f32.mrb[0].mxu0
        %v845 = vpop.f32.mrb[0].mxu0
        %v846 = vadd.f32 %v734, %v845
        %v847 = vpop.f32.mrb[0].mxu0
        %848 = vmatprep.mubr.bf16.mxu0 0
        %849 = vmatmul.mubr.bf16.gmra.mrb[0].mxu0 %v772
        %v850 = vpop.f32.mrb[0].mxu0
        %v851 = vadd.f32 %v734, %v850
        %v852 = vpop.f32.mrb[0].mxu0
        %v853 = vpop.f32.mrb[0].mxu0
        %v854 = vadd.f32 %v734, %v853
        %v855 = vpop.f32.mrb[0].mxu0
        %856 = vmatprep.mubr.bf16.mxu0 0
        %857 = vmatmul.mubr.bf16.gmra.mrb[0].mxu0 %v773
        %v858 = vpop.f32.mrb[0].mxu0
        %v859 = vadd.f32 %v734, %v858
        %v860 = vpop.f32.mrb[0].mxu0
        %v861 = vpop.f32.mrb[0].mxu0
        %v862 = vadd.f32 %v734, %v861
        %v863 = vpop.f32.mrb[0].mxu0
        %864 = vmatprep.mubr.bf16.mxu0 0
        %865 = vmatmul.mubr.bf16.gmra.mrb[0].mxu0 %v774
        %v866 = vpop.f32.mrb[0].mxu0
        %v867 = vadd.f32 %v734, %v866
        %v868 = vpop.f32.mrb[0].mxu0
        %v869 = vpop.f32.mrb[0].mxu0
        %v870 = vadd.f32 %v734, %v869
        %v871 = vpop.f32.mrb[0].mxu0
        %872 = vmatprep.mubr.bf16.mxu0 0
        %873 = vmatmul.mubr.bf16.gmra.mrb[0].mxu0 %v775
        %v874 = vpop.f32.mrb[0].mxu0
        %v875 = vadd.f32 %v734, %v874
        %v876 = vpop.f32.mrb[0].mxu0
        %v877 = vpop.f32.mrb[0].mxu0
        %v878 = vadd.f32 %v734, %v877
        %v879 = vpop.f32.mrb[0].mxu0
        %880 = vdwg.mxu0
        %v881 = vmax.f32 %v819, 0.0
        %v882 = vmax.f32 %v822, 0.0
        %v883 = vmax.f32 %v827, 0.0
        %v884 = vmax.f32 %v830, 0.0
        %v885 = vmax.f32 %v835, 0.0
        %v886 = vmax.f32 %v838, 0.0
        %v887 = vmax.f32 %v843, 0.0
        %v888 = vmax.f32 %v846, 0.0
        %v889 = vmax.f32 %v851, 0.0
        %v890 = vmax.f32 %v854, 0.0
        %v891 = vmax.f32 %v859, 0.0
        %v892 = vmax.f32 %v862, 0.0
        %v893 = vmax.f32 %v867, 0.0
        %v894 = vmax.f32 %v870, 0.0
        %v895 = vmax.f32 %v875, 0.0
        %v896 = vmax.f32 %v878, 0.0
        %v897 = vpack.c.bf16 %v882, %v881
        %v898 = vpack.c.bf16 %v884, %v883
        %v899 = vpack.c.bf16 %v886, %v885
        %v900 = vpack.c.bf16 %v888, %v887
        %v901 = vpack.c.bf16 %v890, %v889
        %v902 = vpack.c.bf16 %v892, %v891
        %v903 = vpack.c.bf16 %v894, %v893
        %v904 = vpack.c.bf16 %v896, %v895
        %v913 = vunpack.c.l.b16 %v897
        %v914 = vunpack.c.h.b16 %v897
        %v915 = vunpack.c.l.b16 %v898
        %v916 = vunpack.c.h.b16 %v898
        %v917 = vunpack.c.l.b16 %v899
        %v918 = vunpack.c.h.b16 %v899
        %v919 = vunpack.c.l.b16 %v900
        %v920 = vunpack.c.h.b16 %v900
        %v921 = vunpack.c.l.b16 %v901
        %v922 = vunpack.c.h.b16 %v901
        %v923 = vunpack.c.l.b16 %v902
        %v924 = vunpack.c.h.b16 %v902
        %v925 = vunpack.c.l.b16 %v903
        %v926 = vunpack.c.h.b16 %v903
        %v927 = vunpack.c.l.b16 %v904
        %v928 = vunpack.c.h.b16 %v904
        %v929 = vpack.c.b16 %v913, %v913
        %v930 = vpack.c.b16 %v914, %v914
        %v931 = vpack.c.b16 %v915, %v915
        %v932 = vpack.c.b16 %v916, %v916
        %v933 = vpack.c.b16 %v917, %v917
        %v934 = vpack.c.b16 %v918, %v918
        %v935 = vpack.c.b16 %v919, %v919
        %v936 = vpack.c.b16 %v920, %v920
        %v937 = vpack.c.b16 %v921, %v921
        %v938 = vpack.c.b16 %v922, %v922
        %v939 = vpack.c.b16 %v923, %v923
        %v940 = vpack.c.b16 %v924, %v924
        %v941 = vpack.c.b16 %v925, %v925
        %v942 = vpack.c.b16 %v926, %v926
        %v943 = vpack.c.b16 %v927, %v927
        %v944 = vpack.c.b16 %v928, %v928
        %961 = vst [vmem:[%s464] sm:$0xf] %v929
        %962 = vst [vmem:[%s464 + $0x4] sm:$0xf] %v930
        %963 = vst [vmem:[%s464 + $0x8] sm:$0xf] %v931
        %964 = vst [vmem:[%s464 + $0xc] sm:$0xf] %v932
        %965 = vst [vmem:[%s464 + $0x10] sm:$0xf] %v933
        %966 = vst [vmem:[%s464 + $0x14] sm:$0xf] %v934
        %967 = vst [vmem:[%s464 + $0x18] sm:$0xf] %v935
        %968 = vst [vmem:[%s464 + $0x1c] sm:$0xf] %v936
        %969 = vst [vmem:[%s464 + $0x20] sm:$0xf] %v937
        %970 = vst [vmem:[%s464 + $0x24] sm:$0xf] %v938
        %971 = vst [vmem:[%s464 + $0x28] sm:$0xf] %v939
        %972 = vst [vmem:[%s464 + $0x2c] sm:$0xf] %v940
        %973 = vst [vmem:[%s464 + $0x30] sm:$0xf] %v941
        %974 = vst [vmem:[%s464 + $0x34] sm:$0xf] %v942
        %975 = vst [vmem:[%s464 + $0x38] sm:$0xf] %v943
        %976 = vst [vmem:[%s464 + $0x3c] sm:$0xf] %v944
        %v977 = vld [vmem:[#allocation8] sm:$0xf]
        %v978 = vld [vmem:[#allocation8 + $0x4] sm:$0xf]
        %v979 = vld [vmem:[#allocation8 + $0x8] sm:$0xf]
        %v980 = vld [vmem:[#allocation8 + $0xc] sm:$0xf]
        %v981 = vld [vmem:[#allocation8 + $0x10] sm:$0xf]
        %v982 = vld [vmem:[#allocation8 + $0x14] sm:$0xf]
        %v983 = vld [vmem:[#allocation8 + $0x18] sm:$0xf]
        %v984 = vld [vmem:[#allocation8 + $0x1c] sm:$0xf]
        %v985 = vld [vmem:[#allocation8 + $0x20] sm:$0xf]
        %v986 = vld [vmem:[#allocation8 + $0x24] sm:$0xf]
        %v987 = vld [vmem:[#allocation8 + $0x28] sm:$0xf]
        %v988 = vld [vmem:[#allocation8 + $0x2c] sm:$0xf]
        %v989 = vld [vmem:[#allocation8 + $0x30] sm:$0xf]
        %v990 = vld [vmem:[#allocation8 + $0x34] sm:$0xf]
        %v991 = vld [vmem:[#allocation8 + $0x38] sm:$0xf]
        %v992 = vld [vmem:[#allocation8 + $0x3c] sm:$0xf]
        %v1009 = vunpack.c.l.b16 %v977
        %v1010 = vunpack.c.l.b16 %v978
        %v1011 = vunpack.c.l.b16 %v979
        %v1012 = vunpack.c.l.b16 %v980
        %v1013 = vunpack.c.l.b16 %v981
        %v1014 = vunpack.c.l.b16 %v982
        %v1015 = vunpack.c.l.b16 %v983
        %v1016 = vunpack.c.l.b16 %v984
        %v1017 = vunpack.c.l.b16 %v985
        %v1018 = vunpack.c.l.b16 %v986
        %v1019 = vunpack.c.l.b16 %v987
        %v1020 = vunpack.c.l.b16 %v988
        %v1021 = vunpack.c.l.b16 %v989
        %v1022 = vunpack.c.l.b16 %v990
        %v1023 = vunpack.c.l.b16 %v991
        %v1024 = vunpack.c.l.b16 %v992
        %v1025 = vpack.c.b16 %v1010, %v1009
        %v1026 = vpack.c.b16 %v1012, %v1011
        %v1027 = vpack.c.b16 %v1014, %v1013
        %v1028 = vpack.c.b16 %v1016, %v1015
        %v1029 = vpack.c.b16 %v1018, %v1017
        %v1030 = vpack.c.b16 %v1020, %v1019
        %v1031 = vpack.c.b16 %v1022, %v1021
        %v1032 = vpack.c.b16 %v1024, %v1023
        %1041 = vmatprep.subr.bf16.mxu0 0
        %1042 = vmatpush1.bf16.msra.mxu0 %v1025
        %1043 = vmatprep.subr.bf16.mxu0 0
        %1044 = vmatpush1.bf16.msra.mxu0 %v1026
        %1045 = vmatprep.subr.bf16.mxu0 0
        %1046 = vmatpush1.bf16.msra.mxu0 %v1027
        %1047 = vmatprep.subr.bf16.mxu0 0
        %1048 = vmatpush1.bf16.msra.mxu0 %v1028
        %1049 = vmatprep.subr.bf16.mxu0 0
        %1050 = vmatpush1.bf16.msra.mxu0 %v1029
        %1051 = vmatprep.subr.bf16.mxu0 0
        %1052 = vmatpush1.bf16.msra.mxu0 %v1030
        %1053 = vmatprep.subr.bf16.mxu0 0
        %1054 = vmatpush1.bf16.msra.mxu0 %v1031
        %1055 = vmatprep.subr.bf16.mxu0 0
        %1056 = vmatpush1.bf16.msra.mxu0 %v1032
        %1057 = vmatprep.subr.bf16.mxu0 0
        %1058 = vmatpush1.bf16.msra.mxu0 0
        %1059 = vmatprep.subr.bf16.mxu0 0
        %1060 = vmatpush1.bf16.msra.mxu0 0
        %1061 = vmatprep.subr.bf16.mxu0 0
        %1062 = vmatpush1.bf16.msra.mxu0 0
        %1063 = vmatprep.subr.bf16.mxu0 0
        %1064 = vmatpush1.bf16.msra.mxu0 0
        %1065 = vmatprep.subr.bf16.mxu0 0
        %1066 = vmatpush1.bf16.msra.mxu0 0
        %1067 = vmatprep.subr.bf16.mxu0 0
        %1068 = vmatpush1.bf16.msra.mxu0 0
        %1069 = vmatprep.subr.bf16.mxu0 0
        %1070 = vmatpush1.bf16.msra.mxu0 0
        %1071 = vmatprep.subr.bf16.mxu0 0
        %1072 = vmatpush1.bf16.msra.mxu0 0
        %1073 = vmatprep.mubr.bf16.mxu0 0
        %1074 = vmatmul.mubr.bf16.gmra.mrb[0].mxu0 %v897
        %v1075 = vpop.f32.mrb[0].mxu0
        %v1076 = vadd.f32 0.0, %v1075
        %v1077 = vpop.f32.mrb[0].mxu0
        %v1078 = vpop.f32.mrb[0].mxu0
        %v1079 = vadd.f32 0.0, %v1078
        %v1080 = vpop.f32.mrb[0].mxu0
        %1081 = vmatprep.mubr.bf16.mxu0 0
        %1082 = vmatmul.mubr.bf16.gmra.mrb[0].mxu0 %v898
        %v1083 = vpop.f32.mrb[0].mxu0
        %v1084 = vadd.f32 0.0, %v1083
        %v1085 = vpop.f32.mrb[0].mxu0
        %v1086 = vpop.f32.mrb[0].mxu0
        %v1087 = vadd.f32 0.0, %v1086
        %v1088 = vpop.f32.mrb[0].mxu0
        %1089 = vmatprep.mubr.bf16.mxu0 0
        %1090 = vmatmul.mubr.bf16.gmra.mrb[0].mxu0 %v899
        %v1091 = vpop.f32.mrb[0].mxu0
        %v1092 = vadd.f32 0.0, %v1091
        %v1093 = vpop.f32.mrb[0].mxu0
        %v1094 = vpop.f32.mrb[0].mxu0
        %v1095 = vadd.f32 0.0, %v1094
        %v1096 = vpop.f32.mrb[0].mxu0
        %1097 = vmatprep.mubr.bf16.mxu0 0
        %1098 = vmatmul.mubr.bf16.gmra.mrb[0].mxu0 %v900
        %v1099 = vpop.f32.mrb[0].mxu0
        %v1100 = vadd.f32 0.0, %v1099
        %v1101 = vpop.f32.mrb[0].mxu0
        %v1102 = vpop.f32.mrb[0].mxu0
        %v1103 = vadd.f32 0.0, %v1102
        %v1104 = vpop.f32.mrb[0].mxu0
        %1105 = vmatprep.mubr.bf16.mxu0 0
        %1106 = vmatmul.mubr.bf16.gmra.mrb[0].mxu0 %v901
        %v1107 = vpop.f32.mrb[0].mxu0
        %v1108 = vadd.f32 0.0, %v1107
        %v1109 = vpop.f32.mrb[0].mxu0
        %v1110 = vpop.f32.mrb[0].mxu0
        %v1111 = vadd.f32 0.0, %v1110
        %v1112 = vpop.f32.mrb[0].mxu0
        %1113 = vmatprep.mubr.bf16.mxu0 0
        %1114 = vmatmul.mubr.bf16.gmra.mrb[0].mxu0 %v902
        %v1115 = vpop.f32.mrb[0].mxu0
        %v1116 = vadd.f32 0.0, %v1115
        %v1117 = vpop.f32.mrb[0].mxu0
        %v1118 = vpop.f32.mrb[0].mxu0
        %v1119 = vadd.f32 0.0, %v1118
        %v1120 = vpop.f32.mrb[0].mxu0
        %1121 = vmatprep.mubr.bf16.mxu0 0
        %1122 = vmatmul.mubr.bf16.gmra.mrb[0].mxu0 %v903
        %v1123 = vpop.f32.mrb[0].mxu0
        %v1124 = vadd.f32 0.0, %v1123
        %v1125 = vpop.f32.mrb[0].mxu0
        %v1126 = vpop.f32.mrb[0].mxu0
        %v1127 = vadd.f32 0.0, %v1126
        %v1128 = vpop.f32.mrb[0].mxu0
        %1129 = vmatprep.mubr.bf16.mxu0 0
        %1130 = vmatmul.mubr.bf16.gmra.mrb[0].mxu0 %v904
        %v1131 = vpop.f32.mrb[0].mxu0
        %v1132 = vadd.f32 0.0, %v1131
        %v1133 = vpop.f32.mrb[0].mxu0
        %v1134 = vpop.f32.mrb[0].mxu0
        %v1135 = vadd.f32 0.0, %v1134
        %v1136 = vpop.f32.mrb[0].mxu0
        %1137 = vdwg.mxu0
        %v1138 = vpack.c.bf16 %v1079, %v1076
        %v1139 = vpack.c.bf16 %v1087, %v1084
        %v1140 = vpack.c.bf16 %v1095, %v1092
        %v1141 = vpack.c.bf16 %v1103, %v1100
        %v1142 = vpack.c.bf16 %v1111, %v1108
        %v1143 = vpack.c.bf16 %v1119, %v1116
        %v1144 = vpack.c.bf16 %v1127, %v1124
        %v1145 = vpack.c.bf16 %v1135, %v1132
        %v1146 = vld [vmem:[%s5] sm:$0x1]
        %v1148 = vlaneseq
        %v1149 = vshrl.u32 %v1148, 7
        %v1150 = vsub.s32 0, %v1149
        %v1151 = vrot.slane %v1146, %v1150
        %1153 = vmatprep.subr.bf16.mxu0 0
        %1154 = vmatpush1.bf16.msra.mxu0 %v1138
        %1155 = vmatprep.subr.bf16.mxu0 0
        %1156 = vmatpush1.bf16.msra.mxu0 %v1139
        %1157 = vmatprep.subr.bf16.mxu0 0
        %1158 = vmatpush1.bf16.msra.mxu0 %v1140
        %1159 = vmatprep.subr.bf16.mxu0 0
        %1160 = vmatpush1.bf16.msra.mxu0 %v1141
        %1161 = vmatprep.subr.bf16.mxu0 0
        %1162 = vmatpush1.bf16.msra.mxu0 %v1142
        %1163 = vmatprep.subr.bf16.mxu0 0
        %1164 = vmatpush1.bf16.msra.mxu0 %v1143
        %1165 = vmatprep.subr.bf16.mxu0 0
        %1166 = vmatpush1.bf16.msra.mxu0 %v1144
        %1167 = vmatprep.subr.bf16.mxu0 0
        %1168 = vmatpush1.bf16.msra.mxu0 %v1145
        %1169 = vmatprep.subr.bf16.mxu0 0
        %1170 = vmatpush1.bf16.msra.mxu0 0
        %1171 = vmatprep.subr.bf16.mxu0 0
        %1172 = vmatpush1.bf16.msra.mxu0 0
        %1173 = vmatprep.subr.bf16.mxu0 0
        %1174 = vmatpush1.bf16.msra.mxu0 0
        %1175 = vmatprep.subr.bf16.mxu0 0
        %1176 = vmatpush1.bf16.msra.mxu0 0
        %1177 = vmatprep.subr.bf16.mxu0 0
        %1178 = vmatpush1.bf16.msra.mxu0 0
        %1179 = vmatprep.subr.bf16.mxu0 0
        %1180 = vmatpush1.bf16.msra.mxu0 0
        %1181 = vmatprep.subr.bf16.mxu0 0
        %1182 = vmatpush1.bf16.msra.mxu0 0
        %1183 = vmatprep.subr.bf16.mxu0 0
        %1184 = vmatpush1.bf16.msra.mxu0 0
        %1185 = vmatprep.mubr.bf16.mxu0 0
        %1186 = vmatmul.mubr.bf16.gmra.mrb[0].mxu0 %v768
        %v1187 = vpop.f32.mrb[0].mxu0
        %v1188 = vadd.f32 %v1151, %v1187
        %v1189 = vpop.f32.mrb[0].mxu0
        %v1190 = vpop.f32.mrb[0].mxu0
        %v1191 = vadd.f32 %v1151, %v1190
        %v1192 = vpop.f32.mrb[0].mxu0
        %1193 = vmatprep.mubr.bf16.mxu0 0
        %1194 = vmatmul.mubr.bf16.gmra.mrb[0].mxu0 %v769
        %v1195 = vpop.f32.mrb[0].mxu0
        %v1196 = vadd.f32 %v1151, %v1195
        %v1197 = vpop.f32.mrb[0].mxu0
        %v1198 = vpop.f32.mrb[0].mxu0
        %v1199 = vadd.f32 %v1151, %v1198
        %v1200 = vpop.f32.mrb[0].mxu0
        %1201 = vmatprep.mubr.bf16.mxu0 0
        %1202 = vmatmul.mubr.bf16.gmra.mrb[0].mxu0 %v770
        %v1203 = vpop.f32.mrb[0].mxu0
        %v1204 = vadd.f32 %v1151, %v1203
        %v1205 = vpop.f32.mrb[0].mxu0
        %v1206 = vpop.f32.mrb[0].mxu0
        %v1207 = vadd.f32 %v1151, %v1206
        %v1208 = vpop.f32.mrb[0].mxu0
        %1209 = vmatprep.mubr.bf16.mxu0 0
        %1210 = vmatmul.mubr.bf16.gmra.mrb[0].mxu0 %v771
        %v1211 = vpop.f32.mrb[0].mxu0
        %v1212 = vadd.f32 %v1151, %v1211
        %v1213 = vpop.f32.mrb[0].mxu0
        %v1214 = vpop.f32.mrb[0].mxu0
        %v1215 = vadd.f32 %v1151, %v1214
        %v1216 = vpop.f32.mrb[0].mxu0
        %1217 = vmatprep.mubr.bf16.mxu0 0
        %1218 = vmatmul.mubr.bf16.gmra.mrb[0].mxu0 %v772
        %v1219 = vpop.f32.mrb[0].mxu0
        %v1220 = vadd.f32 %v1151, %v1219
        %v1221 = vpop.f32.mrb[0].mxu0
        %v1222 = vpop.f32.mrb[0].mxu0
        %v1223 = vadd.f32 %v1151, %v1222
        %v1224 = vpop.f32.mrb[0].mxu0
        %1225 = vmatprep.mubr.bf16.mxu0 0
        %1226 = vmatmul.mubr.bf16.gmra.mrb[0].mxu0 %v773
        %v1227 = vpop.f32.mrb[0].mxu0
        %v1228 = vadd.f32 %v1151, %v1227
        %v1229 = vpop.f32.mrb[0].mxu0
        %v1230 = vpop.f32.mrb[0].mxu0
        %v1231 = vadd.f32 %v1151, %v1230
        %v1232 = vpop.f32.mrb[0].mxu0
        %1233 = vmatprep.mubr.bf16.mxu0 0
        %1234 = vmatmul.mubr.bf16.gmra.mrb[0].mxu0 %v774
        %v1235 = vpop.f32.mrb[0].mxu0
        %v1236 = vadd.f32 %v1151, %v1235
        %v1237 = vpop.f32.mrb[0].mxu0
        %v1238 = vpop.f32.mrb[0].mxu0
        %v1239 = vadd.f32 %v1151, %v1238
        %v1240 = vpop.f32.mrb[0].mxu0
        %1241 = vmatprep.mubr.bf16.mxu0 0
        %1242 = vmatmul.mubr.bf16.gmra.mrb[0].mxu0 %v775
        %v1243 = vpop.f32.mrb[0].mxu0
        %v1244 = vadd.f32 %v1151, %v1243
        %v1245 = vpop.f32.mrb[0].mxu0
        %v1246 = vpop.f32.mrb[0].mxu0
        %v1247 = vadd.f32 %v1151, %v1246
        %v1248 = vpop.f32.mrb[0].mxu0
        %1249 = vdwg.mxu0
        %v1250 = vmax.f32 %v1188, 0.0
        %v1251 = vmax.f32 %v1191, 0.0
        %v1252 = vmax.f32 %v1196, 0.0
        %v1253 = vmax.f32 %v1199, 0.0
        %v1254 = vmax.f32 %v1204, 0.0
        %v1255 = vmax.f32 %v1207, 0.0
        %v1256 = vmax.f32 %v1212, 0.0
        %v1257 = vmax.f32 %v1215, 0.0
        %v1258 = vmax.f32 %v1220, 0.0
        %v1259 = vmax.f32 %v1223, 0.0
        %v1260 = vmax.f32 %v1228, 0.0
        %v1261 = vmax.f32 %v1231, 0.0
        %v1262 = vmax.f32 %v1236, 0.0
        %v1263 = vmax.f32 %v1239, 0.0
        %v1264 = vmax.f32 %v1244, 0.0
        %v1265 = vmax.f32 %v1247, 0.0
        %v1266 = vpack.c.bf16 %v1251, %v1250
        %v1267 = vpack.c.bf16 %v1253, %v1252
        %v1268 = vpack.c.bf16 %v1255, %v1254
        %v1269 = vpack.c.bf16 %v1257, %v1256
        %v1270 = vpack.c.bf16 %v1259, %v1258
        %v1271 = vpack.c.bf16 %v1261, %v1260
        %v1272 = vpack.c.bf16 %v1263, %v1262
        %v1273 = vpack.c.bf16 %v1265, %v1264
        %v1282 = vunpack.c.l.b16 %v1266
        %v1283 = vunpack.c.h.b16 %v1266
        %v1284 = vunpack.c.l.b16 %v1267
        %v1285 = vunpack.c.h.b16 %v1267
        %v1286 = vunpack.c.l.b16 %v1268
        %v1287 = vunpack.c.h.b16 %v1268
        %v1288 = vunpack.c.l.b16 %v1269
        %v1289 = vunpack.c.h.b16 %v1269
        %v1290 = vunpack.c.l.b16 %v1270
        %v1291 = vunpack.c.h.b16 %v1270
        %v1292 = vunpack.c.l.b16 %v1271
        %v1293 = vunpack.c.h.b16 %v1271
        %v1294 = vunpack.c.l.b16 %v1272
        %v1295 = vunpack.c.h.b16 %v1272
        %v1296 = vunpack.c.l.b16 %v1273
        %v1297 = vunpack.c.h.b16 %v1273
        %v1298 = vpack.c.b16 %v1282, %v1282
        %v1299 = vpack.c.b16 %v1283, %v1283
        %v1300 = vpack.c.b16 %v1284, %v1284
        %v1301 = vpack.c.b16 %v1285, %v1285
        %v1302 = vpack.c.b16 %v1286, %v1286
        %v1303 = vpack.c.b16 %v1287, %v1287
        %v1304 = vpack.c.b16 %v1288, %v1288
        %v1305 = vpack.c.b16 %v1289, %v1289
        %v1306 = vpack.c.b16 %v1290, %v1290
        %v1307 = vpack.c.b16 %v1291, %v1291
        %v1308 = vpack.c.b16 %v1292, %v1292
        %v1309 = vpack.c.b16 %v1293, %v1293
        %v1310 = vpack.c.b16 %v1294, %v1294
        %v1311 = vpack.c.b16 %v1295, %v1295
        %v1312 = vpack.c.b16 %v1296, %v1296
        %v1313 = vpack.c.b16 %v1297, %v1297
        %1330 = vst [vmem:[%s471] sm:$0xf] %v1298
        %1331 = vst [vmem:[%s471 + $0x4] sm:$0xf] %v1299
        %1332 = vst [vmem:[%s471 + $0x8] sm:$0xf] %v1300
        %1333 = vst [vmem:[%s471 + $0xc] sm:$0xf] %v1301
        %1334 = vst [vmem:[%s471 + $0x10] sm:$0xf] %v1302
        %1335 = vst [vmem:[%s471 + $0x14] sm:$0xf] %v1303
        %1336 = vst [vmem:[%s471 + $0x18] sm:$0xf] %v1304
        %1337 = vst [vmem:[%s471 + $0x1c] sm:$0xf] %v1305
        %1338 = vst [vmem:[%s471 + $0x20] sm:$0xf] %v1306
        %1339 = vst [vmem:[%s471 + $0x24] sm:$0xf] %v1307
        %1340 = vst [vmem:[%s471 + $0x28] sm:$0xf] %v1308
        %1341 = vst [vmem:[%s471 + $0x2c] sm:$0xf] %v1309
        %1342 = vst [vmem:[%s471 + $0x30] sm:$0xf] %v1310
        %1343 = vst [vmem:[%s471 + $0x34] sm:$0xf] %v1311
        %1344 = vst [vmem:[%s471 + $0x38] sm:$0xf] %v1312
        %1345 = vst [vmem:[%s471 + $0x3c] sm:$0xf] %v1313
        %v1346 = vld [vmem:[#allocation10] sm:$0xf]
        %v1347 = vld [vmem:[#allocation10 + $0x4] sm:$0xf]
        %v1348 = vld [vmem:[#allocation10 + $0x8] sm:$0xf]
        %v1349 = vld [vmem:[#allocation10 + $0xc] sm:$0xf]
        %v1350 = vld [vmem:[#allocation10 + $0x10] sm:$0xf]
        %v1351 = vld [vmem:[#allocation10 + $0x14] sm:$0xf]
        %v1352 = vld [vmem:[#allocation10 + $0x18] sm:$0xf]
        %v1353 = vld [vmem:[#allocation10 + $0x1c] sm:$0xf]
        %v1354 = vld [vmem:[#allocation10 + $0x20] sm:$0xf]
        %v1355 = vld [vmem:[#allocation10 + $0x24] sm:$0xf]
        %v1356 = vld [vmem:[#allocation10 + $0x28] sm:$0xf]
        %v1357 = vld [vmem:[#allocation10 + $0x2c] sm:$0xf]
        %v1358 = vld [vmem:[#allocation10 + $0x30] sm:$0xf]
        %v1359 = vld [vmem:[#allocation10 + $0x34] sm:$0xf]
        %v1360 = vld [vmem:[#allocation10 + $0x38] sm:$0xf]
        %v1361 = vld [vmem:[#allocation10 + $0x3c] sm:$0xf]
        %v1378 = vunpack.c.l.b16 %v1346
        %v1379 = vunpack.c.l.b16 %v1347
        %v1380 = vunpack.c.l.b16 %v1348
        %v1381 = vunpack.c.l.b16 %v1349
        %v1382 = vunpack.c.l.b16 %v1350
        %v1383 = vunpack.c.l.b16 %v1351
        %v1384 = vunpack.c.l.b16 %v1352
        %v1385 = vunpack.c.l.b16 %v1353
        %v1386 = vunpack.c.l.b16 %v1354
        %v1387 = vunpack.c.l.b16 %v1355
        %v1388 = vunpack.c.l.b16 %v1356
        %v1389 = vunpack.c.l.b16 %v1357
        %v1390 = vunpack.c.l.b16 %v1358
        %v1391 = vunpack.c.l.b16 %v1359
        %v1392 = vunpack.c.l.b16 %v1360
        %v1393 = vunpack.c.l.b16 %v1361
        %v1394 = vpack.c.b16 %v1379, %v1378
        %v1395 = vpack.c.b16 %v1381, %v1380
        %v1396 = vpack.c.b16 %v1383, %v1382
        %v1397 = vpack.c.b16 %v1385, %v1384
        %v1398 = vpack.c.b16 %v1387, %v1386
        %v1399 = vpack.c.b16 %v1389, %v1388
        %v1400 = vpack.c.b16 %v1391, %v1390
        %v1401 = vpack.c.b16 %v1393, %v1392
        %1410 = vmatprep.subr.bf16.mxu0 0
        %1411 = vmatpush1.bf16.msra.mxu0 %v1394
        %1412 = vmatprep.subr.bf16.mxu0 0
        %1413 = vmatpush1.bf16.msra.mxu0 %v1395
        %1414 = vmatprep.subr.bf16.mxu0 0
        %1415 = vmatpush1.bf16.msra.mxu0 %v1396
        %1416 = vmatprep.subr.bf16.mxu0 0
        %1417 = vmatpush1.bf16.msra.mxu0 %v1397
        %1418 = vmatprep.subr.bf16.mxu0 0
        %1419 = vmatpush1.bf16.msra.mxu0 %v1398
        %1420 = vmatprep.subr.bf16.mxu0 0
        %1421 = vmatpush1.bf16.msra.mxu0 %v1399
        %1422 = vmatprep.subr.bf16.mxu0 0
        %1423 = vmatpush1.bf16.msra.mxu0 %v1400
        %1424 = vmatprep.subr.bf16.mxu0 0
        %1425 = vmatpush1.bf16.msra.mxu0 %v1401
        %1426 = vmatprep.subr.bf16.mxu0 0
        %1427 = vmatpush1.bf16.msra.mxu0 0
        %1428 = vmatprep.subr.bf16.mxu0 0
        %1429 = vmatpush1.bf16.msra.mxu0 0
        %1430 = vmatprep.subr.bf16.mxu0 0
        %1431 = vmatpush1.bf16.msra.mxu0 0
        %1432 = vmatprep.subr.bf16.mxu0 0
        %1433 = vmatpush1.bf16.msra.mxu0 0
        %1434 = vmatprep.subr.bf16.mxu0 0
        %1435 = vmatpush1.bf16.msra.mxu0 0
        %1436 = vmatprep.subr.bf16.mxu0 0
        %1437 = vmatpush1.bf16.msra.mxu0 0
        %1438 = vmatprep.subr.bf16.mxu0 0
        %1439 = vmatpush1.bf16.msra.mxu0 0
        %1440 = vmatprep.subr.bf16.mxu0 0
        %1441 = vmatpush1.bf16.msra.mxu0 0
        %1442 = vmatprep.mubr.bf16.mxu0 0
        %1443 = vmatmul.mubr.bf16.gmra.mrb[0].mxu0 %v1266
        %v1444 = vpop.f32.mrb[0].mxu0
        %v1445 = vadd.f32 0.0, %v1444
        %v1446 = vpop.f32.mrb[0].mxu0
        %v1447 = vpop.f32.mrb[0].mxu0
        %v1448 = vadd.f32 0.0, %v1447
        %v1449 = vpop.f32.mrb[0].mxu0
        %1450 = vmatprep.mubr.bf16.mxu0 0
        %1451 = vmatmul.mubr.bf16.gmra.mrb[0].mxu0 %v1267
        %v1452 = vpop.f32.mrb[0].mxu0
        %v1453 = vadd.f32 0.0, %v1452
        %v1454 = vpop.f32.mrb[0].mxu0
        %v1455 = vpop.f32.mrb[0].mxu0
        %v1456 = vadd.f32 0.0, %v1455
        %v1457 = vpop.f32.mrb[0].mxu0
        %1458 = vmatprep.mubr.bf16.mxu0 0
        %1459 = vmatmul.mubr.bf16.gmra.mrb[0].mxu0 %v1268
        %v1460 = vpop.f32.mrb[0].mxu0
        %v1461 = vadd.f32 0.0, %v1460
        %v1462 = vpop.f32.mrb[0].mxu0
        %v1463 = vpop.f32.mrb[0].mxu0
        %v1464 = vadd.f32 0.0, %v1463
        %v1465 = vpop.f32.mrb[0].mxu0
        %1466 = vmatprep.mubr.bf16.mxu0 0
        %1467 = vmatmul.mubr.bf16.gmra.mrb[0].mxu0 %v1269
        %v1468 = vpop.f32.mrb[0].mxu0
        %v1469 = vadd.f32 0.0, %v1468
        %v1470 = vpop.f32.mrb[0].mxu0
        %v1471 = vpop.f32.mrb[0].mxu0
        %v1472 = vadd.f32 0.0, %v1471
        %v1473 = vpop.f32.mrb[0].mxu0
        %1474 = vmatprep.mubr.bf16.mxu0 0
        %1475 = vmatmul.mubr.bf16.gmra.mrb[0].mxu0 %v1270
        %v1476 = vpop.f32.mrb[0].mxu0
        %v1477 = vadd.f32 0.0, %v1476
        %v1478 = vpop.f32.mrb[0].mxu0
        %v1479 = vpop.f32.mrb[0].mxu0
        %v1480 = vadd.f32 0.0, %v1479
        %v1481 = vpop.f32.mrb[0].mxu0
        %1482 = vmatprep.mubr.bf16.mxu0 0
        %1483 = vmatmul.mubr.bf16.gmra.mrb[0].mxu0 %v1271
        %v1484 = vpop.f32.mrb[0].mxu0
        %v1485 = vadd.f32 0.0, %v1484
        %v1486 = vpop.f32.mrb[0].mxu0
        %v1487 = vpop.f32.mrb[0].mxu0
        %v1488 = vadd.f32 0.0, %v1487
        %v1489 = vpop.f32.mrb[0].mxu0
        %1490 = vmatprep.mubr.bf16.mxu0 0
        %1491 = vmatmul.mubr.bf16.gmra.mrb[0].mxu0 %v1272
        %v1492 = vpop.f32.mrb[0].mxu0
        %v1493 = vadd.f32 0.0, %v1492
        %v1494 = vpop.f32.mrb[0].mxu0
        %v1495 = vpop.f32.mrb[0].mxu0
        %v1496 = vadd.f32 0.0, %v1495
        %v1497 = vpop.f32.mrb[0].mxu0
        %1498 = vmatprep.mubr.bf16.mxu0 0
        %1499 = vmatmul.mubr.bf16.gmra.mrb[0].mxu0 %v1273
        %v1500 = vpop.f32.mrb[0].mxu0
        %v1501 = vadd.f32 0.0, %v1500
        %v1502 = vpop.f32.mrb[0].mxu0
        %v1503 = vpop.f32.mrb[0].mxu0
        %v1504 = vadd.f32 0.0, %v1503
        %v1505 = vpop.f32.mrb[0].mxu0
        %1506 = vdwg.mxu0
        %v1507 = vpack.c.bf16 %v1448, %v1445
        %v1508 = vpack.c.bf16 %v1456, %v1453
        %v1509 = vpack.c.bf16 %v1464, %v1461
        %v1510 = vpack.c.bf16 %v1472, %v1469
        %v1511 = vpack.c.bf16 %v1480, %v1477
        %v1512 = vpack.c.bf16 %v1488, %v1485
        %v1513 = vpack.c.bf16 %v1496, %v1493
        %v1514 = vpack.c.bf16 %v1504, %v1501
        %v1515 = vld [vmem:[%s7] sm:$0x1]
        %v1517 = vlaneseq
        %v1518 = vshrl.u32 %v1517, 7
        %v1519 = vsub.s32 0, %v1518
        %v1520 = vrot.slane %v1515, %v1519
        %1522 = vmatprep.subr.bf16.mxu0 0
        %1523 = vmatpush1.bf16.msra.mxu0 %v1507
        %1524 = vmatprep.subr.bf16.mxu0 0
        %1525 = vmatpush1.bf16.msra.mxu0 %v1508
        %1526 = vmatprep.subr.bf16.mxu0 0
        %1527 = vmatpush1.bf16.msra.mxu0 %v1509
        %1528 = vmatprep.subr.bf16.mxu0 0
        %1529 = vmatpush1.bf16.msra.mxu0 %v1510
        %1530 = vmatprep.subr.bf16.mxu0 0
        %1531 = vmatpush1.bf16.msra.mxu0 %v1511
        %1532 = vmatprep.subr.bf16.mxu0 0
        %1533 = vmatpush1.bf16.msra.mxu0 %v1512
        %1534 = vmatprep.subr.bf16.mxu0 0
        %1535 = vmatpush1.bf16.msra.mxu0 %v1513
        %1536 = vmatprep.subr.bf16.mxu0 0
        %1537 = vmatpush1.bf16.msra.mxu0 %v1514
        %1538 = vmatprep.subr.bf16.mxu0 0
        %1539 = vmatpush1.bf16.msra.mxu0 0
        %1540 = vmatprep.subr.bf16.mxu0 0
        %1541 = vmatpush1.bf16.msra.mxu0 0
        %1542 = vmatprep.subr.bf16.mxu0 0
        %1543 = vmatpush1.bf16.msra.mxu0 0
        %1544 = vmatprep.subr.bf16.mxu0 0
        %1545 = vmatpush1.bf16.msra.mxu0 0
        %1546 = vmatprep.subr.bf16.mxu0 0
        %1547 = vmatpush1.bf16.msra.mxu0 0
        %1548 = vmatprep.subr.bf16.mxu0 0
        %1549 = vmatpush1.bf16.msra.mxu0 0
        %1550 = vmatprep.subr.bf16.mxu0 0
        %1551 = vmatpush1.bf16.msra.mxu0 0
        %1552 = vmatprep.subr.bf16.mxu0 0
        %1553 = vmatpush1.bf16.msra.mxu0 0
        %1554 = vmatprep.mubr.bf16.mxu0 0
        %1555 = vmatmul.mubr.bf16.gmra.mrb[0].mxu0 %v768
        %v1556 = vpop.f32.mrb[0].mxu0
        %v1557 = vadd.f32 %v1520, %v1556
        %v1558 = vpop.f32.mrb[0].mxu0
        %v1559 = vpop.f32.mrb[0].mxu0
        %v1560 = vadd.f32 %v1520, %v1559
        %v1561 = vpop.f32.mrb[0].mxu0
        %1562 = vmatprep.mubr.bf16.mxu0 0
        %1563 = vmatmul.mubr.bf16.gmra.mrb[0].mxu0 %v769
        %v1564 = vpop.f32.mrb[0].mxu0
        %v1565 = vadd.f32 %v1520, %v1564
        %v1566 = vpop.f32.mrb[0].mxu0
        %v1567 = vpop.f32.mrb[0].mxu0
        %v1568 = vadd.f32 %v1520, %v1567
        %v1569 = vpop.f32.mrb[0].mxu0
        %1570 = vmatprep.mubr.bf16.mxu0 0
        %1571 = vmatmul.mubr.bf16.gmra.mrb[0].mxu0 %v770
        %v1572 = vpop.f32.mrb[0].mxu0
        %v1573 = vadd.f32 %v1520, %v1572
        %v1574 = vpop.f32.mrb[0].mxu0
        %v1575 = vpop.f32.mrb[0].mxu0
        %v1576 = vadd.f32 %v1520, %v1575
        %v1577 = vpop.f32.mrb[0].mxu0
        %1578 = vmatprep.mubr.bf16.mxu0 0
        %1579 = vmatmul.mubr.bf16.gmra.mrb[0].mxu0 %v771
        %v1580 = vpop.f32.mrb[0].mxu0
        %v1581 = vadd.f32 %v1520, %v1580
        %v1582 = vpop.f32.mrb[0].mxu0
        %v1583 = vpop.f32.mrb[0].mxu0
        %v1584 = vadd.f32 %v1520, %v1583
        %v1585 = vpop.f32.mrb[0].mxu0
        %1586 = vmatprep.mubr.bf16.mxu0 0
        %1587 = vmatmul.mubr.bf16.gmra.mrb[0].mxu0 %v772
        %v1588 = vpop.f32.mrb[0].mxu0
        %v1589 = vadd.f32 %v1520, %v1588
        %v1590 = vpop.f32.mrb[0].mxu0
        %v1591 = vpop.f32.mrb[0].mxu0
        %v1592 = vadd.f32 %v1520, %v1591
        %v1593 = vpop.f32.mrb[0].mxu0
        %1594 = vmatprep.mubr.bf16.mxu0 0
        %1595 = vmatmul.mubr.bf16.gmra.mrb[0].mxu0 %v773
        %v1596 = vpop.f32.mrb[0].mxu0
        %v1597 = vadd.f32 %v1520, %v1596
        %v1598 = vpop.f32.mrb[0].mxu0
        %v1599 = vpop.f32.mrb[0].mxu0
        %v1600 = vadd.f32 %v1520, %v1599
        %v1601 = vpop.f32.mrb[0].mxu0
        %1602 = vmatprep.mubr.bf16.mxu0 0
        %1603 = vmatmul.mubr.bf16.gmra.mrb[0].mxu0 %v774
        %v1604 = vpop.f32.mrb[0].mxu0
        %v1605 = vadd.f32 %v1520, %v1604
        %v1606 = vpop.f32.mrb[0].mxu0
        %v1607 = vpop.f32.mrb[0].mxu0
        %v1608 = vadd.f32 %v1520, %v1607
        %v1609 = vpop.f32.mrb[0].mxu0
        %1610 = vmatprep.mubr.bf16.mxu0 0
        %1611 = vmatmul.mubr.bf16.gmra.mrb[0].mxu0 %v775
        %v1612 = vpop.f32.mrb[0].mxu0
        %v1613 = vadd.f32 %v1520, %v1612
        %v1614 = vpop.f32.mrb[0].mxu0
        %v1615 = vpop.f32.mrb[0].mxu0
        %v1616 = vadd.f32 %v1520, %v1615
        %v1617 = vpop.f32.mrb[0].mxu0
        %1618 = vdwg.mxu0
        %v1619 = vmax.f32 %v1557, 0.0
        %v1620 = vmax.f32 %v1560, 0.0
        %v1621 = vmax.f32 %v1565, 0.0
        %v1622 = vmax.f32 %v1568, 0.0
        %v1623 = vmax.f32 %v1573, 0.0
        %v1624 = vmax.f32 %v1576, 0.0
        %v1625 = vmax.f32 %v1581, 0.0
        %v1626 = vmax.f32 %v1584, 0.0
        %v1627 = vmax.f32 %v1589, 0.0
        %v1628 = vmax.f32 %v1592, 0.0
        %v1629 = vmax.f32 %v1597, 0.0
        %v1630 = vmax.f32 %v1600, 0.0
        %v1631 = vmax.f32 %v1605, 0.0
        %v1632 = vmax.f32 %v1608, 0.0
        %v1633 = vmax.f32 %v1613, 0.0
        %v1634 = vmax.f32 %v1616, 0.0
        %v1635 = vpack.c.bf16 %v1620, %v1619
        %v1636 = vpack.c.bf16 %v1622, %v1621
        %v1637 = vpack.c.bf16 %v1624, %v1623
        %v1638 = vpack.c.bf16 %v1626, %v1625
        %v1639 = vpack.c.bf16 %v1628, %v1627
        %v1640 = vpack.c.bf16 %v1630, %v1629
        %v1641 = vpack.c.bf16 %v1632, %v1631
        %v1642 = vpack.c.bf16 %v1634, %v1633
        %v1651 = vunpack.c.l.b16 %v1635
        %v1652 = vunpack.c.h.b16 %v1635
        %v1653 = vunpack.c.l.b16 %v1636
        %v1654 = vunpack.c.h.b16 %v1636
        %v1655 = vunpack.c.l.b16 %v1637
        %v1656 = vunpack.c.h.b16 %v1637
        %v1657 = vunpack.c.l.b16 %v1638
        %v1658 = vunpack.c.h.b16 %v1638
        %v1659 = vunpack.c.l.b16 %v1639
        %v1660 = vunpack.c.h.b16 %v1639
        %v1661 = vunpack.c.l.b16 %v1640
        %v1662 = vunpack.c.h.b16 %v1640
        %v1663 = vunpack.c.l.b16 %v1641
        %v1664 = vunpack.c.h.b16 %v1641
        %v1665 = vunpack.c.l.b16 %v1642
        %v1666 = vunpack.c.h.b16 %v1642
        %v1667 = vpack.c.b16 %v1651, %v1651
        %v1668 = vpack.c.b16 %v1652, %v1652
        %v1669 = vpack.c.b16 %v1653, %v1653
        %v1670 = vpack.c.b16 %v1654, %v1654
        %v1671 = vpack.c.b16 %v1655, %v1655
        %v1672 = vpack.c.b16 %v1656, %v1656
        %v1673 = vpack.c.b16 %v1657, %v1657
        %v1674 = vpack.c.b16 %v1658, %v1658
        %v1675 = vpack.c.b16 %v1659, %v1659
        %v1676 = vpack.c.b16 %v1660, %v1660
        %v1677 = vpack.c.b16 %v1661, %v1661
        %v1678 = vpack.c.b16 %v1662, %v1662
        %v1679 = vpack.c.b16 %v1663, %v1663
        %v1680 = vpack.c.b16 %v1664, %v1664
        %v1681 = vpack.c.b16 %v1665, %v1665
        %v1682 = vpack.c.b16 %v1666, %v1666
        %1699 = vst [vmem:[%s478] sm:$0xf] %v1667
        %1700 = vst [vmem:[%s478 + $0x4] sm:$0xf] %v1668
        %1701 = vst [vmem:[%s478 + $0x8] sm:$0xf] %v1669
        %1702 = vst [vmem:[%s478 + $0xc] sm:$0xf] %v1670
        %1703 = vst [vmem:[%s478 + $0x10] sm:$0xf] %v1671
        %1704 = vst [vmem:[%s478 + $0x14] sm:$0xf] %v1672
        %1705 = vst [vmem:[%s478 + $0x18] sm:$0xf] %v1673
        %1706 = vst [vmem:[%s478 + $0x1c] sm:$0xf] %v1674
        %1707 = vst [vmem:[%s478 + $0x20] sm:$0xf] %v1675
        %1708 = vst [vmem:[%s478 + $0x24] sm:$0xf] %v1676
        %1709 = vst [vmem:[%s478 + $0x28] sm:$0xf] %v1677
        %1710 = vst [vmem:[%s478 + $0x2c] sm:$0xf] %v1678
        %1711 = vst [vmem:[%s478 + $0x30] sm:$0xf] %v1679
        %1712 = vst [vmem:[%s478 + $0x34] sm:$0xf] %v1680
        %1713 = vst [vmem:[%s478 + $0x38] sm:$0xf] %v1681
        %1714 = vst [vmem:[%s478 + $0x3c] sm:$0xf] %v1682
        %s1715 = sand.u32 %s221, 1
        %s1716 = scalar_lea.sflag [#allocation4], %s1715
        %s1717 = sand.u32 %s221, 1
        %s1718 = smul.addr %s1717, 64
        %s1719 = scalar_lea.vmem [#allocation11], %s1718
        %s1720 = sand.u32 %s35, 1
        %s1721 = scalar_lea.sflag [#allocation13], %s1720
        %s1722 = sand.u32 %s247, 1
        %s1723 = smul.addr %s1722, 64
        %s1724 = scalar_lea.vmem [#allocation12], %s1723
        %s1725 = sand.u32 %s35, 1
        %s1726 = scalar_lea.sflag [#allocation13], %s1725
        %s1727 = sand.u32 %s273, 1
        %s1728 = smul.addr %s1727, 64
        %s1729 = scalar_lea.vmem [#allocation14], %s1728
        // Predicated region
        $region73: #{tpu_custom_call.1} parent=51 // pred_check
          %p1730 = pneg %p231
        $region74: #{tpu_custom_call.1} parent=51 // pred_check_branch
          %1732 = sbr.rel (%p1730) target = $region76
        $region75: #{tpu_custom_call.1} parent=51 // pred_region
          %s1734 = ssub.s32 1024, 1024
          %1735 = vsyncadd %s1716, %s1734
          %s1736 = smul.addr %s35, 16
          %s1737 = smul.addr %s1736, 64
          %s1738 = scalar_lea.hbm %s8, %s1737
          %s1739 = sshll.u32 %s1719, 4
          %s1740 = int_to_ptr.vmem [resolvable:$true] %s1739
          %1745 = dma.vmem_to_hbm [thread:$0]  %s1740, 1024, %s1738, %s1716, 64, 64, 4
        $region76: #{tpu_custom_call.1} parent=51 // pred_fallthru
          _
        // Predicated region
        $region77: #{tpu_custom_call.1} parent=51 // pred_check
          %p1746 = pneg %p257
        $region78: #{tpu_custom_call.1} parent=51 // pred_check_branch
          %1748 = sbr.rel (%p1746) target = $region80
        $region79: #{tpu_custom_call.1} parent=51 // pred_region
          %s1750 = ssub.s32 1024, 1024
          %1751 = vsyncadd %s1721, %s1750
          %s1752 = smul.addr %s35, 16
          %s1753 = smul.addr %s1752, 64
          %s1754 = scalar_lea.hbm %s9, %s1753
          %s1755 = sshll.u32 %s1724, 4
          %s1756 = int_to_ptr.vmem [resolvable:$true] %s1755
          %1761 = dma.vmem_to_hbm [thread:$0]  %s1756, 1024, %s1754, %s1721, 64, 64, 4
        $region80: #{tpu_custom_call.1} parent=51 // pred_fallthru
          _
        // Predicated region
        $region81: #{tpu_custom_call.1} parent=51 // pred_check
          %p1762 = pneg %p283
        $region82: #{tpu_custom_call.1} parent=51 // pred_check_branch
          %1764 = sbr.rel (%p1762) target = $region84
        $region83: #{tpu_custom_call.1} parent=51 // pred_region
          %s1766 = ssub.s32 1024, 1024
          %1767 = vsyncadd %s1726, %s1766
          %s1768 = smul.addr %s35, 16
          %s1769 = smul.addr %s1768, 64
          %s1770 = scalar_lea.hbm %s10, %s1769
          %s1771 = sshll.u32 %s1729, 4
          %s1772 = int_to_ptr.vmem [resolvable:$true] %s1771
          %1777 = dma.vmem_to_hbm [thread:$0]  %s1772, 1024, %s1770, %s1726, 64, 64, 4
        $region84: #{tpu_custom_call.1} parent=51 // pred_fallthru
          _
      $region52: #{tpu_custom_call.1} parent=5 // pred_fallthru
        _
      %p1778 = scmp.le.s32.totalorder 2, %s30
      // Predicated region
      $region85: #{tpu_custom_call.1} parent=5 // pred_check
        %p1779 = pneg %p1778
      $region86: #{tpu_custom_call.1} parent=5 // pred_check_branch
        %1781 = sbr.rel (%p1779) target = $region88
      $region87: #{tpu_custom_call.1} parent=5 // pred_region
        %s1782 = ssub.s32 %s30, 2
        // Predicated region
        $region89: #{tpu_custom_call.1} parent=87 // pred_check
          %p1783 = pneg %p237
        $region90: #{tpu_custom_call.1} parent=87 // pred_check_branch
          %1785 = sbr.rel (%p1783) target = $region92
        $region91: #{tpu_custom_call.1} parent=87 // pred_region
          %s1786 = sand.u32 %s222, 1
          %s1787 = scalar_lea.sflag [#allocation4], %s1786
          %s1788 = sand.u32 %s222, 1
          %s1789 = smul.addr %s1788, 64
          %s1790 = scalar_lea.vmem [#allocation11], %s1789
          %1791 = dma.done %s1787, 1024
        $region92: #{tpu_custom_call.1} parent=87 // pred_fallthru
          _
        // Predicated region
        $region93: #{tpu_custom_call.1} parent=87 // pred_check
          %p1792 = pneg %p263
        $region94: #{tpu_custom_call.1} parent=87 // pred_check_branch
          %1794 = sbr.rel (%p1792) target = $region96
        $region95: #{tpu_custom_call.1} parent=87 // pred_region
          %s1795 = sand.u32 %s36, 1
          %s1796 = scalar_lea.sflag [#allocation13], %s1795
          %s1797 = sand.u32 %s248, 1
          %s1798 = smul.addr %s1797, 64
          %s1799 = scalar_lea.vmem [#allocation12], %s1798
          %1800 = dma.done %s1796, 1024
        $region96: #{tpu_custom_call.1} parent=87 // pred_fallthru
          _
        // Predicated region
        $region97: #{tpu_custom_call.1} parent=87 // pred_check
          %p1801 = pneg %p289
        $region98: #{tpu_custom_call.1} parent=87 // pred_check_branch
          %1803 = sbr.rel (%p1801) target = $region100
        $region99: #{tpu_custom_call.1} parent=87 // pred_region
          %s1804 = sand.u32 %s36, 1
          %s1805 = scalar_lea.sflag [#allocation13], %s1804
          %s1806 = sand.u32 %s274, 1
          %s1807 = smul.addr %s1806, 64
          %s1808 = scalar_lea.vmem [#allocation14], %s1807
          %1809 = dma.done %s1805, 1024
        $region100: #{tpu_custom_call.1} parent=87 // pred_fallthru
          _
      $region88: #{tpu_custom_call.1} parent=5 // pred_fallthru
        _
    $region6: #{tpu_custom_call.1} parent=1 // loop_footer
      %s34 = sadd.s32 1, %s30
    $region7: #{tpu_custom_call.1} parent=1 // loop_footer_branch
      %29 = sbr.rel target = $region3
    $region8: #{tpu_custom_call.1} parent=1 // loop_exit
      _
    %1810 = vsyncpa [#allocation3], 1
    %s1811 = scalar_lea.sflag [#allocation3], 1
    %1812 = vsyncpa %s1811, 1
    %1813 = vsyncpa [#allocation6], 1
    %s1814 = scalar_lea.sflag [#allocation6], 1
    %1815 = vsyncpa %s1814, 1
    %1816 = vsyncpa [#allocation9], 1
    %1817 = vsyncpa [#allocation4], 1
    %s1818 = scalar_lea.sflag [#allocation4], 1
    %1819 = vsyncpa %s1818, 1
    %1820 = vsyncpa [#allocation13], 1
    %s1821 = scalar_lea.sflag [#allocation13], 1
    %1822 = vsyncpa %s1821, 1

</llo_original>
